<compile_context>
chip_gen: v7x
topology: tpu7x:2x2x1
jax: 0.10.0
libtpu: 0.0.40
codegen_flags: <defaults>
</compile_context>

<pallas_src>
import jax
import jax.numpy as jnp
from jax import lax
from jax.experimental import pallas as pl
from jax.experimental.pallas import tpu as pltpu

# ---- model dims (globals, mirroring the PyTorch script) ----
d_model = 32
n_heads = 4
d_k = 8
d_v = 8
assert d_k * n_heads == d_model

# dot_general dimension_numbers: contract the LAST axis of both operands
# (i.e. A @ B^T without an explicit transpose).
_DN_TRANS_B = (((1,), (1,)), ((), ()))


# ----------------------------------------------------------------------------
# Fused MHA kernel: one grid step == one batch element.
# ----------------------------------------------------------------------------
def _mha_kernel(iq_ref, ik_ref, iv_ref, m_ref,
                wq_ref, wk_ref, wv_ref, wfc_ref,
                out_ref, attn_ref, ctx_sc):
    # iq/ik/iv_ref: [1, S, d_model]; m_ref: [1, S, S] int32 (nonzero == masked)
    # wq/wk/wv_ref: [H*d, d_model] (PyTorch Linear layout [out, in])
    # wfc_ref:      [d_model, H*d_v]
    # out_ref:      [1, S, d_model]; attn_ref: [1, H, S, S]
    # ctx_sc:       VMEM scratch [S, H*d_v]
    x_q = iq_ref[0]          # [S, d_model]
    x_k = ik_ref[0]
    x_v = iv_ref[0]
    mask = m_ref[0]          # [S, S]

    # Projections: y = x @ W^T via trans-B dot_general (no XLU transpose).
    q = lax.dot_general(x_q, wq_ref[...], _DN_TRANS_B,
                        preferred_element_type=jnp.float32)   # [S, H*d_k]
    k = lax.dot_general(x_k, wk_ref[...], _DN_TRANS_B,
                        preferred_element_type=jnp.float32)   # [S, H*d_k]
    v = lax.dot_general(x_v, wv_ref[...], _DN_TRANS_B,
                        preferred_element_type=jnp.float32)   # [S, H*d_v]

    scale = jnp.float32(1.0 / (float(d_k) ** 0.5))
    masked = mask != 0

    # Per-head attention, unrolled (n_heads is small & static). Heads live as
    # contiguous lane slices of q/k/v, so no transposes are needed.
    for h in range(n_heads):
        q_h = q[:, h * d_k:(h + 1) * d_k]                     # [S, d_k]
        k_h = k[:, h * d_k:(h + 1) * d_k]                     # [S, d_k]
        v_h = v[:, h * d_v:(h + 1) * d_v]                     # [S, d_v]

        # scores = (q_h @ k_h^T) / sqrt(d_k), masked_fill(mask, -1e9)
        scores = lax.dot_general(q_h, k_h, _DN_TRANS_B,
                                 preferred_element_type=jnp.float32) * scale
        scores = jnp.where(masked, jnp.float32(-1.0e9), scores)

        # Softmax along the last dim (numerically stabilized).
        # Note: fully-masked rows become a uniform distribution over the masked
        # positions (finite -1e9 fill), matching the PyTorch reference behavior.
        scores = scores - jnp.max(scores, axis=-1, keepdims=True)
        e = jnp.exp(scores)
        attn_h = e * pl.reciprocal(jnp.sum(e, axis=-1, keepdims=True),
                                   approx=False)              # [S, S]

        ctx_h = jnp.dot(attn_h, v_h,
                        preferred_element_type=jnp.float32)   # [S, d_v]

        attn_ref[0, h] = attn_h
        ctx_sc[:, h * d_v:(h + 1) * d_v] = ctx_h              # pack heads on lanes

    # Output projection: [S, H*d_v] @ fc^T -> [S, d_model] (lane-dense store).
    out_ref[0] = lax.dot_general(ctx_sc[...], wfc_ref[...], _DN_TRANS_B,
                                 preferred_element_type=jnp.float32)


# ----------------------------------------------------------------------------
# Wrapper
# ----------------------------------------------------------------------------
def multi_head_attention(params, input_Q, input_K, input_V, attn_mask):
    """
    input_Q/K/V: [B, S, d_model] float32
    attn_mask:   [B, S, S] bool (True == masked)
    returns (output [B, S, d_model], attn [B, H, S, S])
    """
    B, S, _ = input_Q.shape
    W_Q, W_K, W_V, W_fc = params["W_Q"], params["W_K"], params["W_V"], params["fc"]
    mask_i32 = attn_mask.astype(jnp.int32)

    out_shapes = (
        jax.ShapeDtypeStruct((B, S, d_model), jnp.float32),
        jax.ShapeDtypeStruct((B, n_heads, S, S), jnp.float32),
    )

    output, attn = pl.pallas_call(
        _mha_kernel,
        out_shape=out_shapes,
        grid=(B,),
        in_specs=[
            pl.BlockSpec((1, S, d_model), lambda b: (b, 0, 0)),   # input_Q
            pl.BlockSpec((1, S, d_model), lambda b: (b, 0, 0)),   # input_K
            pl.BlockSpec((1, S, d_model), lambda b: (b, 0, 0)),   # input_V
            pl.BlockSpec((1, S, S), lambda b: (b, 0, 0)),         # mask (per batch)
            pl.BlockSpec((d_k * n_heads, d_model), lambda b: (0, 0)),  # W_Q
            pl.BlockSpec((d_k * n_heads, d_model), lambda b: (0, 0)),  # W_K
            pl.BlockSpec((d_v * n_heads, d_model), lambda b: (0, 0)),  # W_V
            pl.BlockSpec((d_model, n_heads * d_v), lambda b: (0, 0)),  # fc
        ],
        out_specs=(
            pl.BlockSpec((1, S, d_model), lambda b: (b, 0, 0)),
            pl.BlockSpec((1, n_heads, S, S), lambda b: (b, 0, 0, 0)),
        ),
        scratch_shapes=[pltpu.VMEM((S, n_heads * d_v), jnp.float32)],
        compiler_params=pltpu.CompilerParams(
            dimension_semantics=("parallel",)),
    )(input_Q, input_K, input_V, mask_i32, W_Q, W_K, W_V, W_fc)

    return output, attn


def init_params(key):
    k1, k2, k3, k4 = jax.random.split(key, 4)
    # PyTorch nn.Linear weight shape is [out_features, in_features]
    scale = 0.1
    return {
        "W_Q": scale * jax.random.normal(k1, (d_k * n_heads, d_model), jnp.float32),
        "W_K": scale * jax.random.normal(k2, (d_k * n_heads, d_model), jnp.float32),
        "W_V": scale * jax.random.normal(k3, (d_v * n_heads, d_model), jnp.float32),
        "fc": scale * jax.random.normal(k4, (d_model, n_heads * d_v), jnp.float32),
    }


if __name__ == "__main__":
    B, S = 2, 8
    key = jax.random.PRNGKey(0)
    kp, kq, kk, kv, km = jax.random.split(key, 5)

    params = init_params(kp)
    input_Q = jax.random.normal(kq, (B, S, d_model), jnp.float32)
    input_K = jax.random.normal(kk, (B, S, d_model), jnp.float32)
    input_V = jax.random.normal(kv, (B, S, d_model), jnp.float32)
    # padding-style mask: True == masked position
    attn_mask = jax.random.bernoulli(km, 0.2, (B, S, S))

    output, attn = multi_head_attention(params, input_Q, input_K, input_V, attn_mask)
    jax.block_until_ready((output, attn))

    # quick sanity vs. pure-JAX reference (mirrors the PyTorch module exactly)
    def ref(params, iq, ik, iv, mask):
        def proj(x, w, dh):
            return (x @ w.T).reshape(B, S, n_heads, dh).transpose(0, 2, 1, 3)
        Q = proj(iq, params["W_Q"], d_k)
        K = proj(ik, params["W_K"], d_k)
        V = proj(iv, params["W_V"], d_v)
        scores = jnp.einsum("bhqd,bhkd->bhqk", Q, K) / jnp.sqrt(jnp.float32(d_k))
        scores = jnp.where(mask[:, None, :, :], -1e9, scores)
        a = jax.nn.softmax(scores, axis=-1)
        ctx = jnp.einsum("bhqk,bhkd->bhqd", a, V)
        ctx = ctx.transpose(0, 2, 1, 3).reshape(B, S, n_heads * d_v)
        return ctx @ params["fc"].T, a

    out_ref, attn_ref = ref(params, input_Q, input_K, input_V, attn_mask)
    assert jnp.allclose(output, out_ref, atol=1e-4, rtol=1e-4)
    assert jnp.allclose(attn, attn_ref, atol=1e-4, rtol=1e-4)

    print("KERNEL_OK")
</pallas_src>

<mosaic_0001>
module attributes {stable_mosaic.version = 11 : i64} {
  func.func @_mha_kernel(%arg0: i32, %arg1: memref<1x8x32xf32, #tpu.memory_space<vmem>>, %arg2: memref<1x8x32xf32, #tpu.memory_space<vmem>>, %arg3: memref<1x8x32xf32, #tpu.memory_space<vmem>>, %arg4: memref<1x8x8xi32, #tpu.memory_space<vmem>>, %arg5: memref<32x32xf32, #tpu.memory_space<vmem>>, %arg6: memref<32x32xf32, #tpu.memory_space<vmem>>, %arg7: memref<32x32xf32, #tpu.memory_space<vmem>>, %arg8: memref<32x32xf32, #tpu.memory_space<vmem>>, %arg9: memref<1x8x32xf32, #tpu.memory_space<vmem>>, %arg10: memref<1x4x8x8xf32, #tpu.memory_space<vmem>>, %arg11: memref<8x32xf32, #tpu.memory_space<vmem>>) attributes {dimension_semantics = [#tpu.dimension_semantics<parallel>], iteration_bounds = array<i64: 2>, scalar_prefetch = 0 : i64, scratch_operands = 1 : i64, tpu.core_type = #tpu.core_type<tc>, window_params = [{transform_indices = @transform_0, window_bounds = array<i64: 1, 8, 32>}, {transform_indices = @transform_1, window_bounds = array<i64: 1, 8, 32>}, {transform_indices = @transform_2, window_bounds = array<i64: 1, 8, 32>}, {transform_indices = @transform_3, window_bounds = array<i64: 1, 8, 8>}, {pipeline_mode = #tpu.pipeline_mode<synchronous>, transform_indices = @transform_4, window_bounds = array<i64: 32, 32>}, {pipeline_mode = #tpu.pipeline_mode<synchronous>, transform_indices = @transform_5, window_bounds = array<i64: 32, 32>}, {pipeline_mode = #tpu.pipeline_mode<synchronous>, transform_indices = @transform_6, window_bounds = array<i64: 32, 32>}, {pipeline_mode = #tpu.pipeline_mode<synchronous>, transform_indices = @transform_7, window_bounds = array<i64: 32, 32>}, {transform_indices = @transform_8, window_bounds = array<i64: 1, 8, 32>}, {transform_indices = @transform_9, window_bounds = array<i64: 1, 4, 8, 8>}]} {
    %c0 = arith.constant 0 : index
    %c0_0 = arith.constant 0 : index
    %c0_1 = arith.constant 0 : index
    %0 = vector.load %arg1[%c0, %c0_0, %c0_1] : memref<1x8x32xf32, #tpu.memory_space<vmem>>, vector<1x8x32xf32>
    %1 = vector.shape_cast %0 : vector<1x8x32xf32> to vector<8x32xf32>
    %c0_2 = arith.constant 0 : index
    %c0_3 = arith.constant 0 : index
    %c0_4 = arith.constant 0 : index
    %2 = vector.load %arg2[%c0_2, %c0_3, %c0_4] : memref<1x8x32xf32, #tpu.memory_space<vmem>>, vector<1x8x32xf32>
    %3 = vector.shape_cast %2 : vector<1x8x32xf32> to vector<8x32xf32>
    %c0_5 = arith.constant 0 : index
    %c0_6 = arith.constant 0 : index
    %c0_7 = arith.constant 0 : index
    %4 = vector.load %arg3[%c0_5, %c0_6, %c0_7] : memref<1x8x32xf32, #tpu.memory_space<vmem>>, vector<1x8x32xf32>
    %5 = vector.shape_cast %4 : vector<1x8x32xf32> to vector<8x32xf32>
    %c0_8 = arith.constant 0 : index
    %c0_9 = arith.constant 0 : index
    %c0_10 = arith.constant 0 : index
    %6 = vector.load %arg4[%c0_8, %c0_9, %c0_10] : memref<1x8x8xi32, #tpu.memory_space<vmem>>, vector<1x8x8xi32>
    %7 = vector.shape_cast %6 : vector<1x8x8xi32> to vector<8x8xi32>
    %c0_11 = arith.constant 0 : index
    %c0_12 = arith.constant 0 : index
    %8 = vector.load %arg5[%c0_11, %c0_12] : memref<32x32xf32, #tpu.memory_space<vmem>>, vector<32x32xf32>
    %cst = arith.constant dense<0.000000e+00> : vector<8x32xf32>
    %9 = tpu.matmul %1, %8, %cst {dimension_numbers = #tpu.dot_dimension_numbers<[1], [1], [0], [0], [0, 0, 1, 0], [], []>} : vector<8x32xf32>, vector<32x32xf32>, vector<8x32xf32> -> vector<8x32xf32>
    %c0_13 = arith.constant 0 : index
    %c0_14 = arith.constant 0 : index
    %10 = vector.load %arg6[%c0_13, %c0_14] : memref<32x32xf32, #tpu.memory_space<vmem>>, vector<32x32xf32>
    %cst_15 = arith.constant dense<0.000000e+00> : vector<8x32xf32>
    %11 = tpu.matmul %3, %10, %cst_15 {dimension_numbers = #tpu.dot_dimension_numbers<[1], [1], [0], [0], [0, 0, 1, 0], [], []>} : vector<8x32xf32>, vector<32x32xf32>, vector<8x32xf32> -> vector<8x32xf32>
    %c0_16 = arith.constant 0 : index
    %c0_17 = arith.constant 0 : index
    %12 = vector.load %arg7[%c0_16, %c0_17] : memref<32x32xf32, #tpu.memory_space<vmem>>, vector<32x32xf32>
    %cst_18 = arith.constant dense<0.000000e+00> : vector<8x32xf32>
    %13 = tpu.matmul %5, %12, %cst_18 {dimension_numbers = #tpu.dot_dimension_numbers<[1], [1], [0], [0], [0, 0, 1, 0], [], []>} : vector<8x32xf32>, vector<32x32xf32>, vector<8x32xf32> -> vector<8x32xf32>
    %c0_i32 = arith.constant 0 : i32
    %14 = vector.broadcast %c0_i32 : i32 to vector<8x8xi32>
    %15 = arith.cmpi ne, %7, %14 : vector<8x8xi32>
    %16 = vector.extract_strided_slice %9 {offsets = [0, 0], sizes = [8, 8], strides = [1, 1]} : vector<8x32xf32> to vector<8x8xf32>
    %17 = vector.extract_strided_slice %11 {offsets = [0, 0], sizes = [8, 8], strides = [1, 1]} : vector<8x32xf32> to vector<8x8xf32>
    %18 = vector.extract_strided_slice %13 {offsets = [0, 0], sizes = [8, 8], strides = [1, 1]} : vector<8x32xf32> to vector<8x8xf32>
    %cst_19 = arith.constant dense<0.000000e+00> : vector<8x8xf32>
    %19 = tpu.matmul %16, %17, %cst_19 {dimension_numbers = #tpu.dot_dimension_numbers<[1], [1], [0], [0], [0, 0, 1, 0], [], []>} : vector<8x8xf32>, vector<8x8xf32>, vector<8x8xf32> -> vector<8x8xf32>
    %cst_20 = arith.constant 0.353553385 : f32
    %20 = vector.broadcast %cst_20 : f32 to vector<8x8xf32>
    %21 = arith.mulf %19, %20 : vector<8x8xf32>
    %cst_21 = arith.constant -1.000000e+09 : f32
    %22 = vector.broadcast %cst_21 : f32 to vector<8x8xf32>
    %23 = arith.select %15, %22, %21 : vector<8x8xi1>, vector<8x8xf32>
    %cst_22 = arith.constant dense<0xFF800000> : vector<8xf32>
    %24 = vector.multi_reduction <maximumf>, %23, %cst_22 [1] : vector<8x8xf32> to vector<8xf32>
    %25 = vector.shape_cast %24 : vector<8xf32> to vector<8x1xf32>
    %26 = vector.broadcast %25 : vector<8x1xf32> to vector<8x8xf32>
    %27 = arith.subf %23, %26 : vector<8x8xf32>
    %28 = math.exp %27 : vector<8x8xf32>
    %cst_23 = arith.constant dense<0.000000e+00> : vector<8xf32>
    %29 = vector.multi_reduction <add>, %28, %cst_23 [1] : vector<8x8xf32> to vector<8xf32>
    %30 = vector.shape_cast %29 : vector<8xf32> to vector<8x1xf32>
    %31 = tpu.reciprocal %30 : vector<8x1xf32> -> vector<8x1xf32>
    %32 = vector.broadcast %31 : vector<8x1xf32> to vector<8x8xf32>
    %33 = arith.mulf %28, %32 : vector<8x8xf32>
    %cst_24 = arith.constant dense<0.000000e+00> : vector<8x8xf32>
    %34 = tpu.matmul %33, %18, %cst_24 {dimension_numbers = #tpu.dot_dimension_numbers<[1], [0], [0], [1], [0, 0, 1, 1], [], []>} : vector<8x8xf32>, vector<8x8xf32>, vector<8x8xf32> -> vector<8x8xf32>
    %c0_25 = arith.constant 0 : index
    %c0_26 = arith.constant 0 : index
    %c0_27 = arith.constant 0 : index
    %c0_28 = arith.constant 0 : index
    %35 = vector.load %arg10[%c0_25, %c0_26, %c0_27, %c0_28] : memref<1x4x8x8xf32, #tpu.memory_space<vmem>>, vector<1x1x8x8xf32>
    %36 = vector.shape_cast %35 : vector<1x1x8x8xf32> to vector<8x8xf32>
    %37 = vector.shape_cast %33 : vector<8x8xf32> to vector<1x1x8x8xf32>
    tpu.vector_store %arg10[%c0_25, %c0_26, %c0_27, %c0_28], %37 {strides = array<i32>} : memref<1x4x8x8xf32, #tpu.memory_space<vmem>>, vector<1x1x8x8xf32>,
    %c0_29 = arith.constant 0 : index
    %c0_30 = arith.constant 0 : index
    %38 = vector.load %arg11[%c0_29, %c0_30] : memref<8x32xf32, #tpu.memory_space<vmem>>, vector<8x8xf32>
    tpu.vector_store %arg11[%c0_29, %c0_30], %34 {strides = array<i32>} : memref<8x32xf32, #tpu.memory_space<vmem>>, vector<8x8xf32>,
    %39 = vector.extract_strided_slice %9 {offsets = [0, 8], sizes = [8, 8], strides = [1, 1]} : vector<8x32xf32> to vector<8x8xf32>
    %40 = vector.extract_strided_slice %11 {offsets = [0, 8], sizes = [8, 8], strides = [1, 1]} : vector<8x32xf32> to vector<8x8xf32>
    %41 = vector.extract_strided_slice %13 {offsets = [0, 8], sizes = [8, 8], strides = [1, 1]} : vector<8x32xf32> to vector<8x8xf32>
    %cst_31 = arith.constant dense<0.000000e+00> : vector<8x8xf32>
    %42 = tpu.matmul %39, %40, %cst_31 {dimension_numbers = #tpu.dot_dimension_numbers<[1], [1], [0], [0], [0, 0, 1, 0], [], []>} : vector<8x8xf32>, vector<8x8xf32>, vector<8x8xf32> -> vector<8x8xf32>
    %cst_32 = arith.constant 0.353553385 : f32
    %43 = vector.broadcast %cst_32 : f32 to vector<8x8xf32>
    %44 = arith.mulf %42, %43 : vector<8x8xf32>
    %cst_33 = arith.constant -1.000000e+09 : f32
    %45 = vector.broadcast %cst_33 : f32 to vector<8x8xf32>
    %46 = arith.select %15, %45, %44 : vector<8x8xi1>, vector<8x8xf32>
    %cst_34 = arith.constant dense<0xFF800000> : vector<8xf32>
    %47 = vector.multi_reduction <maximumf>, %46, %cst_34 [1] : vector<8x8xf32> to vector<8xf32>
    %48 = vector.shape_cast %47 : vector<8xf32> to vector<8x1xf32>
    %49 = vector.broadcast %48 : vector<8x1xf32> to vector<8x8xf32>
    %50 = arith.subf %46, %49 : vector<8x8xf32>
    %51 = math.exp %50 : vector<8x8xf32>
    %cst_35 = arith.constant dense<0.000000e+00> : vector<8xf32>
    %52 = vector.multi_reduction <add>, %51, %cst_35 [1] : vector<8x8xf32> to vector<8xf32>
    %53 = vector.shape_cast %52 : vector<8xf32> to vector<8x1xf32>
    %54 = tpu.reciprocal %53 : vector<8x1xf32> -> vector<8x1xf32>
    %55 = vector.broadcast %54 : vector<8x1xf32> to vector<8x8xf32>
    %56 = arith.mulf %51, %55 : vector<8x8xf32>
    %cst_36 = arith.constant dense<0.000000e+00> : vector<8x8xf32>
    %57 = tpu.matmul %56, %41, %cst_36 {dimension_numbers = #tpu.dot_dimension_numbers<[1], [0], [0], [1], [0, 0, 1, 1], [], []>} : vector<8x8xf32>, vector<8x8xf32>, vector<8x8xf32> -> vector<8x8xf32>
    %c0_37 = arith.constant 0 : index
    %c1 = arith.constant 1 : index
    %c0_38 = arith.constant 0 : index
    %c0_39 = arith.constant 0 : index
    %58 = vector.load %arg10[%c0_37, %c1, %c0_38, %c0_39] : memref<1x4x8x8xf32, #tpu.memory_space<vmem>>, vector<1x1x8x8xf32>
    %59 = vector.shape_cast %58 : vector<1x1x8x8xf32> to vector<8x8xf32>
    %60 = vector.shape_cast %56 : vector<8x8xf32> to vector<1x1x8x8xf32>
    tpu.vector_store %arg10[%c0_37, %c1, %c0_38, %c0_39], %60 {strides = array<i32>} : memref<1x4x8x8xf32, #tpu.memory_space<vmem>>, vector<1x1x8x8xf32>,
    %c0_40 = arith.constant 0 : index
    %c8 = arith.constant 8 : index
    %61 = vector.load %arg11[%c0_40, %c8] : memref<8x32xf32, #tpu.memory_space<vmem>>, vector<8x8xf32>
    tpu.vector_store %arg11[%c0_40, %c8], %57 {strides = array<i32>} : memref<8x32xf32, #tpu.memory_space<vmem>>, vector<8x8xf32>,
    %62 = vector.extract_strided_slice %9 {offsets = [0, 16], sizes = [8, 8], strides = [1, 1]} : vector<8x32xf32> to vector<8x8xf32>
    %63 = vector.extract_strided_slice %11 {offsets = [0, 16], sizes = [8, 8], strides = [1, 1]} : vector<8x32xf32> to vector<8x8xf32>
    %64 = vector.extract_strided_slice %13 {offsets = [0, 16], sizes = [8, 8], strides = [1, 1]} : vector<8x32xf32> to vector<8x8xf32>
    %cst_41 = arith.constant dense<0.000000e+00> : vector<8x8xf32>
    %65 = tpu.matmul %62, %63, %cst_41 {dimension_numbers = #tpu.dot_dimension_numbers<[1], [1], [0], [0], [0, 0, 1, 0], [], []>} : vector<8x8xf32>, vector<8x8xf32>, vector<8x8xf32> -> vector<8x8xf32>
    %cst_42 = arith.constant 0.353553385 : f32
    %66 = vector.broadcast %cst_42 : f32 to vector<8x8xf32>
    %67 = arith.mulf %65, %66 : vector<8x8xf32>
    %cst_43 = arith.constant -1.000000e+09 : f32
    %68 = vector.broadcast %cst_43 : f32 to vector<8x8xf32>
    %69 = arith.select %15, %68, %67 : vector<8x8xi1>, vector<8x8xf32>
    %cst_44 = arith.constant dense<0xFF800000> : vector<8xf32>
    %70 = vector.multi_reduction <maximumf>, %69, %cst_44 [1] : vector<8x8xf32> to vector<8xf32>
    %71 = vector.shape_cast %70 : vector<8xf32> to vector<8x1xf32>
    %72 = vector.broadcast %71 : vector<8x1xf32> to vector<8x8xf32>
    %73 = arith.subf %69, %72 : vector<8x8xf32>
    %74 = math.exp %73 : vector<8x8xf32>
    %cst_45 = arith.constant dense<0.000000e+00> : vector<8xf32>
    %75 = vector.multi_reduction <add>, %74, %cst_45 [1] : vector<8x8xf32> to vector<8xf32>
    %76 = vector.shape_cast %75 : vector<8xf32> to vector<8x1xf32>
    %77 = tpu.reciprocal %76 : vector<8x1xf32> -> vector<8x1xf32>
    %78 = vector.broadcast %77 : vector<8x1xf32> to vector<8x8xf32>
    %79 = arith.mulf %74, %78 : vector<8x8xf32>
    %cst_46 = arith.constant dense<0.000000e+00> : vector<8x8xf32>
    %80 = tpu.matmul %79, %64, %cst_46 {dimension_numbers = #tpu.dot_dimension_numbers<[1], [0], [0], [1], [0, 0, 1, 1], [], []>} : vector<8x8xf32>, vector<8x8xf32>, vector<8x8xf32> -> vector<8x8xf32>
    %c0_47 = arith.constant 0 : index
    %c2 = arith.constant 2 : index
    %c0_48 = arith.constant 0 : index
    %c0_49 = arith.constant 0 : index
    %81 = vector.load %arg10[%c0_47, %c2, %c0_48, %c0_49] : memref<1x4x8x8xf32, #tpu.memory_space<vmem>>, vector<1x1x8x8xf32>
    %82 = vector.shape_cast %81 : vector<1x1x8x8xf32> to vector<8x8xf32>
    %83 = vector.shape_cast %79 : vector<8x8xf32> to vector<1x1x8x8xf32>
    tpu.vector_store %arg10[%c0_47, %c2, %c0_48, %c0_49], %83 {strides = array<i32>} : memref<1x4x8x8xf32, #tpu.memory_space<vmem>>, vector<1x1x8x8xf32>,
    %c0_50 = arith.constant 0 : index
    %c16 = arith.constant 16 : index
    %84 = vector.load %arg11[%c0_50, %c16] : memref<8x32xf32, #tpu.memory_space<vmem>>, vector<8x8xf32>
    tpu.vector_store %arg11[%c0_50, %c16], %80 {strides = array<i32>} : memref<8x32xf32, #tpu.memory_space<vmem>>, vector<8x8xf32>,
    %85 = vector.extract_strided_slice %9 {offsets = [0, 24], sizes = [8, 8], strides = [1, 1]} : vector<8x32xf32> to vector<8x8xf32>
    %86 = vector.extract_strided_slice %11 {offsets = [0, 24], sizes = [8, 8], strides = [1, 1]} : vector<8x32xf32> to vector<8x8xf32>
    %87 = vector.extract_strided_slice %13 {offsets = [0, 24], sizes = [8, 8], strides = [1, 1]} : vector<8x32xf32> to vector<8x8xf32>
    %cst_51 = arith.constant dense<0.000000e+00> : vector<8x8xf32>
    %88 = tpu.matmul %85, %86, %cst_51 {dimension_numbers = #tpu.dot_dimension_numbers<[1], [1], [0], [0], [0, 0, 1, 0], [], []>} : vector<8x8xf32>, vector<8x8xf32>, vector<8x8xf32> -> vector<8x8xf32>
    %cst_52 = arith.constant 0.353553385 : f32
    %89 = vector.broadcast %cst_52 : f32 to vector<8x8xf32>
    %90 = arith.mulf %88, %89 : vector<8x8xf32>
    %cst_53 = arith.constant -1.000000e+09 : f32
    %91 = vector.broadcast %cst_53 : f32 to vector<8x8xf32>
    %92 = arith.select %15, %91, %90 : vector<8x8xi1>, vector<8x8xf32>
    %cst_54 = arith.constant dense<0xFF800000> : vector<8xf32>
    %93 = vector.multi_reduction <maximumf>, %92, %cst_54 [1] : vector<8x8xf32> to vector<8xf32>
    %94 = vector.shape_cast %93 : vector<8xf32> to vector<8x1xf32>
    %95 = vector.broadcast %94 : vector<8x1xf32> to vector<8x8xf32>
    %96 = arith.subf %92, %95 : vector<8x8xf32>
    %97 = math.exp %96 : vector<8x8xf32>
    %cst_55 = arith.constant dense<0.000000e+00> : vector<8xf32>
    %98 = vector.multi_reduction <add>, %97, %cst_55 [1] : vector<8x8xf32> to vector<8xf32>
    %99 = vector.shape_cast %98 : vector<8xf32> to vector<8x1xf32>
    %100 = tpu.reciprocal %99 : vector<8x1xf32> -> vector<8x1xf32>
    %101 = vector.broadcast %100 : vector<8x1xf32> to vector<8x8xf32>
    %102 = arith.mulf %97, %101 : vector<8x8xf32>
    %cst_56 = arith.constant dense<0.000000e+00> : vector<8x8xf32>
    %103 = tpu.matmul %102, %87, %cst_56 {dimension_numbers = #tpu.dot_dimension_numbers<[1], [0], [0], [1], [0, 0, 1, 1], [], []>} : vector<8x8xf32>, vector<8x8xf32>, vector<8x8xf32> -> vector<8x8xf32>
    %c0_57 = arith.constant 0 : index
    %c3 = arith.constant 3 : index
    %c0_58 = arith.constant 0 : index
    %c0_59 = arith.constant 0 : index
    %104 = vector.load %arg10[%c0_57, %c3, %c0_58, %c0_59] : memref<1x4x8x8xf32, #tpu.memory_space<vmem>>, vector<1x1x8x8xf32>
    %105 = vector.shape_cast %104 : vector<1x1x8x8xf32> to vector<8x8xf32>
    %106 = vector.shape_cast %102 : vector<8x8xf32> to vector<1x1x8x8xf32>
    tpu.vector_store %arg10[%c0_57, %c3, %c0_58, %c0_59], %106 {strides = array<i32>} : memref<1x4x8x8xf32, #tpu.memory_space<vmem>>, vector<1x1x8x8xf32>,
    %c0_60 = arith.constant 0 : index
    %c24 = arith.constant 24 : index
    %107 = vector.load %arg11[%c0_60, %c24] : memref<8x32xf32, #tpu.memory_space<vmem>>, vector<8x8xf32>
    tpu.vector_store %arg11[%c0_60, %c24], %103 {strides = array<i32>} : memref<8x32xf32, #tpu.memory_space<vmem>>, vector<8x8xf32>,
    %c0_61 = arith.constant 0 : index
    %c0_62 = arith.constant 0 : index
    %108 = vector.load %arg11[%c0_61, %c0_62] : memref<8x32xf32, #tpu.memory_space<vmem>>, vector<8x32xf32>
    %c0_63 = arith.constant 0 : index
    %c0_64 = arith.constant 0 : index
    %109 = vector.load %arg8[%c0_63, %c0_64] : memref<32x32xf32, #tpu.memory_space<vmem>>, vector<32x32xf32>
    %cst_65 = arith.constant dense<0.000000e+00> : vector<8x32xf32>
    %110 = tpu.matmul %108, %109, %cst_65 {dimension_numbers = #tpu.dot_dimension_numbers<[1], [1], [0], [0], [0, 0, 1, 0], [], []>} : vector<8x32xf32>, vector<32x32xf32>, vector<8x32xf32> -> vector<8x32xf32>
    %c0_66 = arith.constant 0 : index
    %c0_67 = arith.constant 0 : index
    %c0_68 = arith.constant 0 : index
    %111 = vector.load %arg9[%c0_66, %c0_67, %c0_68] : memref<1x8x32xf32, #tpu.memory_space<vmem>>, vector<1x8x32xf32>
    %112 = vector.shape_cast %111 : vector<1x8x32xf32> to vector<8x32xf32>
    %113 = vector.shape_cast %110 : vector<8x32xf32> to vector<1x8x32xf32>
    tpu.vector_store %arg9[%c0_66, %c0_67, %c0_68], %113 {strides = array<i32>} : memref<1x8x32xf32, #tpu.memory_space<vmem>>, vector<1x8x32xf32>,
    return
  }
  func.func @transform_0(%arg0: i32) -> (i32, i32, i32) {
    %c0_i32 = arith.constant 0 : i32
    %c0_i32_0 = arith.constant 0 : i32
    %c0_i32_1 = arith.constant 0 : i32
    return %arg0, %c0_i32, %c0_i32_0 : i32, i32, i32
  }
  func.func @transform_1(%arg0: i32) -> (i32, i32, i32) {
    %c0_i32 = arith.constant 0 : i32
    %c0_i32_0 = arith.constant 0 : i32
    %c0_i32_1 = arith.constant 0 : i32
    return %arg0, %c0_i32, %c0_i32_0 : i32, i32, i32
  }
  func.func @transform_2(%arg0: i32) -> (i32, i32, i32) {
    %c0_i32 = arith.constant 0 : i32
    %c0_i32_0 = arith.constant 0 : i32
    %c0_i32_1 = arith.constant 0 : i32
    return %arg0, %c0_i32, %c0_i32_0 : i32, i32, i32
  }
  func.func @transform_3(%arg0: i32) -> (i32, i32, i32) {
    %c0_i32 = arith.constant 0 : i32
    %c0_i32_0 = arith.constant 0 : i32
    %c0_i32_1 = arith.constant 0 : i32
    return %arg0, %c0_i32, %c0_i32_0 : i32, i32, i32
  }
  func.func @transform_4(%arg0: i32) -> (i32, i32) {
    %c0_i32 = arith.constant 0 : i32
    %c0_i32_0 = arith.constant 0 : i32
    %c0_i32_1 = arith.constant 0 : i32
    return %c0_i32, %c0_i32_0 : i32, i32
  }
  func.func @transform_5(%arg0: i32) -> (i32, i32) {
    %c0_i32 = arith.constant 0 : i32
    %c0_i32_0 = arith.constant 0 : i32
    %c0_i32_1 = arith.constant 0 : i32
    return %c0_i32, %c0_i32_0 : i32, i32
  }
  func.func @transform_6(%arg0: i32) -> (i32, i32) {
    %c0_i32 = arith.constant 0 : i32
    %c0_i32_0 = arith.constant 0 : i32
    %c0_i32_1 = arith.constant 0 : i32
    return %c0_i32, %c0_i32_0 : i32, i32
  }
  func.func @transform_7(%arg0: i32) -> (i32, i32) {
    %c0_i32 = arith.constant 0 : i32
    %c0_i32_0 = arith.constant 0 : i32
    %c0_i32_1 = arith.constant 0 : i32
    return %c0_i32, %c0_i32_0 : i32, i32
  }
  func.func @transform_8(%arg0: i32) -> (i32, i32, i32) {
    %c0_i32 = arith.constant 0 : i32
    %c0_i32_0 = arith.constant 0 : i32
    %c0_i32_1 = arith.constant 0 : i32
    return %arg0, %c0_i32, %c0_i32_0 : i32, i32, i32
  }
  func.func @transform_9(%arg0: i32) -> (i32, i32, i32, i32) {
    %c0_i32 = arith.constant 0 : i32
    %c0_i32_0 = arith.constant 0 : i32
    %c0_i32_1 = arith.constant 0 : i32
    %c0_i32_2 = arith.constant 0 : i32
    return %arg0, %c0_i32, %c0_i32_0, %c0_i32_1 : i32, i32, i32, i32
  }
}

</mosaic_0001>

<llo_original>
// kernel: tpu_custom_call.1
$region0: #{tpu_custom_call.1}
  #allocation0 [shape = 'u32[]', space=smem, size = 0x4, offset = 0x4, fixed_abs, tag = 'smem constant byte address 0x4 - core index']
  #allocation1 [shape = 'u32[144,128]{1,0:T(1,128)}', space=vmem, size = 0x12000, scoped, tag = 'internal scratch']
  #allocation2 [shape = 'f32[8,32]{1,0:T(8,128)}', space=vmem, size = 0x1000, scoped, tag = 'scratch operand']
  %s0 = inlined_call_operand.hbm [shape: f32[2,8,32], index: 0, kind: input, shape index: {}]
  %s1 = inlined_call_operand.hbm [shape: f32[2,8,32], index: 1, kind: input, shape index: {}]
  %s2 = inlined_call_operand.hbm [shape: f32[2,8,32], index: 2, kind: input, shape index: {}]
  %s3 = inlined_call_operand.hbm [shape: s32[2,8,8], index: 3, kind: input, shape index: {}]
  %s4 = inlined_call_operand.hbm [shape: f32[32,32], index: 4, kind: input, shape index: {}]
  %s5 = inlined_call_operand.hbm [shape: f32[32,32], index: 5, kind: input, shape index: {}]
  %s6 = inlined_call_operand.hbm [shape: f32[32,32], index: 6, kind: input, shape index: {}]
  %s7 = inlined_call_operand.hbm [shape: f32[32,32], index: 7, kind: input, shape index: {}]
  %s8 = inlined_call_operand.hbm [shape: f32[2,8,32], index: 8, kind: output, shape index: {0}]
  %s9 = inlined_call_operand.hbm [shape: f32[2,4,8,8], index: 9, kind: output, shape index: {1}]
  %10 = xla_tuple %s8, %s9
  %s11 = sld [smem:[#allocation0]]
  $region105: #{tpu_custom_call.1} parent=0
    _
  %s13 = ssub.s32 1, %s11
  %s14 = scalar_select 0, %s13, %s11
  $region1: #{tpu_custom_call.1} parent=0
    #allocation3 [shape = 'u8[8192]{0}', space=vmem, size = 0x2000, scoped, tag = 'input window, operand 0']
    #allocation4 [shape = 's32[2]{0}', space=sflag, size = 0x8, scoped, tag = 'scoped memory for tpu_custom_call.1']
    #allocation5 [shape = 's32[2]{0}', space=sflag, size = 0x8, scoped, tag = 'scoped memory for tpu_custom_call.1']
    #allocation6 [shape = 'u8[8192]{0}', space=vmem, size = 0x2000, scoped, tag = 'input window, operand 1']
    #allocation7 [shape = 's32[2]{0}', space=sflag, size = 0x8, scoped, tag = 'scoped memory for tpu_custom_call.1']
    #allocation8 [shape = 'u8[8192]{0}', space=vmem, size = 0x2000, scoped, tag = 'input window, operand 2']
    #allocation9 [shape = 'u8[8192]{0}', space=vmem, size = 0x2000, scoped, tag = 'input window, operand 3']
    #allocation10 [shape = 's32[2]{0}', space=sflag, size = 0x8, scoped, tag = 'scoped memory for tpu_custom_call.1']
    #allocation11 [shape = 'u8[16384]{0}', space=vmem, size = 0x4000, scoped, tag = 'input window, operand 4, single buffered']
    #allocation12 [shape = 'u8[16384]{0}', space=vmem, size = 0x4000, scoped, tag = 'input window, operand 5, single buffered']
    #allocation13 [shape = 's32[1]{0}', space=sflag, size = 0x4, scoped, tag = 'scoped memory for tpu_custom_call.1']
    #allocation14 [shape = 'u8[16384]{0}', space=vmem, size = 0x4000, scoped, tag = 'input window, operand 6, single buffered']
    #allocation15 [shape = 'u8[16384]{0}', space=vmem, size = 0x4000, scoped, tag = 'input window, operand 7, single buffered']
    #allocation16 [shape = 's32[1]{0}', space=sflag, size = 0x4, scoped, tag = 'scoped memory for tpu_custom_call.1']
    #allocation17 [shape = 'u8[8192]{0}', space=vmem, size = 0x2000, scoped, tag = 'output window, operand 0']
    #allocation18 [shape = 'u8[32768]{0}', space=vmem, size = 0x8000, scoped, tag = 'output window, operand 1']
    #allocation19 [shape = 's32[2]{0}', space=sflag, size = 0x8, scoped, tag = 'scoped memory for tpu_custom_call.1']
    %15 = vsyncpa [#allocation4], 0
    %s16 = scalar_lea.sflag [#allocation4], 1
    %17 = vsyncpa %s16, 0
    %18 = vsyncpa [#allocation7], 0
    %s19 = scalar_lea.sflag [#allocation7], 1
    %20 = vsyncpa %s19, 0
    %21 = vsyncpa [#allocation10], 0
    %s22 = scalar_lea.sflag [#allocation10], 1
    %23 = vsyncpa %s22, 0
    %24 = vsyncpa [#allocation13], 0
    %25 = vsyncpa [#allocation16], 0
    %26 = vsyncpa [#allocation5], 0
    %s27 = scalar_lea.sflag [#allocation5], 1
    %28 = vsyncpa %s27, 0
    %29 = vsyncpa [#allocation19], 0
    %s30 = scalar_lea.sflag [#allocation19], 1
    %31 = vsyncpa %s30, 0
    loop: start=0, step=1, limit=4
    $region2: #{tpu_custom_call.1} parent=1 // loop_pre_header
      _
    $region3: #{tpu_custom_call.1} parent=1 // loop_header
      %s33 = sphi 0, %s37
      %p34 = scmp.ge.s32.totalorder %s33, 4
      %s43 = sphi 0, %s45
      %s46 = sphi 0, %s43
      %s47 = sphi 0, %s46
      %s63 = sphi 0, %s47
      %s69 = sphi 0, %s71
      %s72 = sphi 0, %s69
      %s73 = sphi 0, %s72
      %s89 = sphi 0, %s73
      %s95 = sphi 0, %s97
      %s98 = sphi 0, %s95
      %s99 = sphi 0, %s98
      %s115 = sphi 0, %s99
      %s121 = sphi 0, %s123
      %s124 = sphi 0, %s121
      %s125 = sphi 0, %s124
      %s141 = sphi 0, %s125
      %s145 = sphi 0, %s145
      %s147 = sphi 0, %s145
      %s148 = sphi 0, %s147
      %s162 = sphi 0, %s148
      %s166 = sphi 0, %s166
      %s168 = sphi 0, %s166
      %s169 = sphi 0, %s168
      %s183 = sphi 0, %s169
      %s187 = sphi 0, %s187
      %s189 = sphi 0, %s187
      %s190 = sphi 0, %s189
      %s204 = sphi 0, %s190
      %s208 = sphi 0, %s208
      %s210 = sphi 0, %s208
      %s211 = sphi 0, %s210
      %s225 = sphi 0, %s211
      %s231 = sphi 0, %s233
      %s234 = sphi 0, %s231
      %s235 = sphi 0, %s234
      %s251 = sphi 0, %s235
      %s257 = sphi 0, %s259
      %s260 = sphi 0, %s257
      %s261 = sphi 0, %s260
      %s277 = sphi 0, %s261
    $region4: #{tpu_custom_call.1} parent=1 // loop_header_branch
      %36 = sbr.rel (%p34) target = $region8
    $region5: #{tpu_custom_call.1} parent=1 // loop_body
      %s38 = ssub.s32 %s33, 1
      %s39 = ssub.s32 %s33, 2
      %s40 = sadd.s32 %s33, 1
      %s41 = ssub.s32 %s33, %s40
      %p42 = scmp.eq.s32.totalorder %s41, 0
      %s44 = sadd.s32 %s43, 1
      %s45 = scalar_select %p42, %s43, %s44
      %p48 = pneg %p42
      %p49 = scmp.eq.s32.totalorder %s33, 1
      %p50 = por %p48, %p49
      %p51 = scmp.ne.s32.totalorder %s43, %s46
      %p52 = scmp.eq.s32.totalorder %s33, 0
      %p53 = por %p51, %p52
      %p54 = scmp.ne.s32.totalorder %s43, %s46
      %p55 = scmp.eq.s32.totalorder %s38, 1
      %p56 = por %p54, %p55
      %p57 = scmp.ne.s32.totalorder %s46, %s47
      %p58 = scmp.eq.s32.totalorder %s38, 0
      %p59 = por %p57, %p58
      %p60 = scmp.ne.s32.totalorder %s46, %s47
      %p61 = scmp.eq.s32.totalorder %s39, 1
      %p62 = por %p60, %p61
      %p64 = scmp.ne.s32.totalorder %s47, %s63
      %p65 = scmp.eq.s32.totalorder %s39, 0
      %p66 = por %p64, %p65
      %s67 = ssub.s32 %s33, %s40
      %p68 = scmp.eq.s32.totalorder %s67, 0
      %s70 = sadd.s32 %s69, 1
      %s71 = scalar_select %p68, %s69, %s70
      %p74 = pneg %p68
      %p75 = scmp.eq.s32.totalorder %s33, 1
      %p76 = por %p74, %p75
      %p77 = scmp.ne.s32.totalorder %s69, %s72
      %p78 = scmp.eq.s32.totalorder %s33, 0
      %p79 = por %p77, %p78
      %p80 = scmp.ne.s32.totalorder %s69, %s72
      %p81 = scmp.eq.s32.totalorder %s38, 1
      %p82 = por %p80, %p81
      %p83 = scmp.ne.s32.totalorder %s72, %s73
      %p84 = scmp.eq.s32.totalorder %s38, 0
      %p85 = por %p83, %p84
      %p86 = scmp.ne.s32.totalorder %s72, %s73
      %p87 = scmp.eq.s32.totalorder %s39, 1
      %p88 = por %p86, %p87
      %p90 = scmp.ne.s32.totalorder %s73, %s89
      %p91 = scmp.eq.s32.totalorder %s39, 0
      %p92 = por %p90, %p91
      %s93 = ssub.s32 %s33, %s40
      %p94 = scmp.eq.s32.totalorder %s93, 0
      %s96 = sadd.s32 %s95, 1
      %s97 = scalar_select %p94, %s95, %s96
      %p100 = pneg %p94
      %p101 = scmp.eq.s32.totalorder %s33, 1
      %p102 = por %p100, %p101
      %p103 = scmp.ne.s32.totalorder %s95, %s98
      %p104 = scmp.eq.s32.totalorder %s33, 0
      %p105 = por %p103, %p104
      %p106 = scmp.ne.s32.totalorder %s95, %s98
      %p107 = scmp.eq.s32.totalorder %s38, 1
      %p108 = por %p106, %p107
      %p109 = scmp.ne.s32.totalorder %s98, %s99
      %p110 = scmp.eq.s32.totalorder %s38, 0
      %p111 = por %p109, %p110
      %p112 = scmp.ne.s32.totalorder %s98, %s99
      %p113 = scmp.eq.s32.totalorder %s39, 1
      %p114 = por %p112, %p113
      %p116 = scmp.ne.s32.totalorder %s99, %s115
      %p117 = scmp.eq.s32.totalorder %s39, 0
      %p118 = por %p116, %p117
      %s119 = ssub.s32 %s33, %s40
      %p120 = scmp.eq.s32.totalorder %s119, 0
      %s122 = sadd.s32 %s121, 1
      %s123 = scalar_select %p120, %s121, %s122
      %p126 = pneg %p120
      %p127 = scmp.eq.s32.totalorder %s33, 1
      %p128 = por %p126, %p127
      %p129 = scmp.ne.s32.totalorder %s121, %s124
      %p130 = scmp.eq.s32.totalorder %s33, 0
      %p131 = por %p129, %p130
      %p132 = scmp.ne.s32.totalorder %s121, %s124
      %p133 = scmp.eq.s32.totalorder %s38, 1
      %p134 = por %p132, %p133
      %p135 = scmp.ne.s32.totalorder %s124, %s125
      %p136 = scmp.eq.s32.totalorder %s38, 0
      %p137 = por %p135, %p136
      %p138 = scmp.ne.s32.totalorder %s124, %s125
      %p139 = scmp.eq.s32.totalorder %s39, 1
      %p140 = por %p138, %p139
      %p142 = scmp.ne.s32.totalorder %s125, %s141
      %p143 = scmp.eq.s32.totalorder %s39, 0
      %p144 = por %p142, %p143
      %s146 = sadd.s32 %s145, 1
      %p149 = scmp.eq.s32.totalorder %s33, 1
      %p150 = scmp.ne.s32.totalorder %s145, %s147
      %p151 = scmp.eq.s32.totalorder %s33, 0
      %p152 = por %p150, %p151
      %p153 = scmp.ne.s32.totalorder %s145, %s147
      %p154 = scmp.eq.s32.totalorder %s38, 1
      %p155 = por %p153, %p154
      %p156 = scmp.ne.s32.totalorder %s147, %s148
      %p157 = scmp.eq.s32.totalorder %s38, 0
      %p158 = por %p156, %p157
      %p159 = scmp.ne.s32.totalorder %s147, %s148
      %p160 = scmp.eq.s32.totalorder %s39, 1
      %p161 = por %p159, %p160
      %p163 = scmp.ne.s32.totalorder %s148, %s162
      %p164 = scmp.eq.s32.totalorder %s39, 0
      %p165 = por %p163, %p164
      %s167 = sadd.s32 %s166, 1
      %p170 = scmp.eq.s32.totalorder %s33, 1
      %p171 = scmp.ne.s32.totalorder %s166, %s168
      %p172 = scmp.eq.s32.totalorder %s33, 0
      %p173 = por %p171, %p172
      %p174 = scmp.ne.s32.totalorder %s166, %s168
      %p175 = scmp.eq.s32.totalorder %s38, 1
      %p176 = por %p174, %p175
      %p177 = scmp.ne.s32.totalorder %s168, %s169
      %p178 = scmp.eq.s32.totalorder %s38, 0
      %p179 = por %p177, %p178
      %p180 = scmp.ne.s32.totalorder %s168, %s169
      %p181 = scmp.eq.s32.totalorder %s39, 1
      %p182 = por %p180, %p181
      %p184 = scmp.ne.s32.totalorder %s169, %s183
      %p185 = scmp.eq.s32.totalorder %s39, 0
      %p186 = por %p184, %p185
      %s188 = sadd.s32 %s187, 1
      %p191 = scmp.eq.s32.totalorder %s33, 1
      %p192 = scmp.ne.s32.totalorder %s187, %s189
      %p193 = scmp.eq.s32.totalorder %s33, 0
      %p194 = por %p192, %p193
      %p195 = scmp.ne.s32.totalorder %s187, %s189
      %p196 = scmp.eq.s32.totalorder %s38, 1
      %p197 = por %p195, %p196
      %p198 = scmp.ne.s32.totalorder %s189, %s190
      %p199 = scmp.eq.s32.totalorder %s38, 0
      %p200 = por %p198, %p199
      %p201 = scmp.ne.s32.totalorder %s189, %s190
      %p202 = scmp.eq.s32.totalorder %s39, 1
      %p203 = por %p201, %p202
      %p205 = scmp.ne.s32.totalorder %s190, %s204
      %p206 = scmp.eq.s32.totalorder %s39, 0
      %p207 = por %p205, %p206
      %s209 = sadd.s32 %s208, 1
      %p212 = scmp.eq.s32.totalorder %s33, 1
      %p213 = scmp.ne.s32.totalorder %s208, %s210
      %p214 = scmp.eq.s32.totalorder %s33, 0
      %p215 = por %p213, %p214
      %p216 = scmp.ne.s32.totalorder %s208, %s210
      %p217 = scmp.eq.s32.totalorder %s38, 1
      %p218 = por %p216, %p217
      %p219 = scmp.ne.s32.totalorder %s210, %s211
      %p220 = scmp.eq.s32.totalorder %s38, 0
      %p221 = por %p219, %p220
      %p222 = scmp.ne.s32.totalorder %s210, %s211
      %p223 = scmp.eq.s32.totalorder %s39, 1
      %p224 = por %p222, %p223
      %p226 = scmp.ne.s32.totalorder %s211, %s225
      %p227 = scmp.eq.s32.totalorder %s39, 0
      %p228 = por %p226, %p227
      %s229 = ssub.s32 %s33, %s40
      %p230 = scmp.eq.s32.totalorder %s229, 0
      %s232 = sadd.s32 %s231, 1
      %s233 = scalar_select %p230, %s231, %s232
      %p236 = pneg %p230
      %p237 = scmp.eq.s32.totalorder %s33, 1
      %p238 = por %p236, %p237
      %p239 = scmp.ne.s32.totalorder %s231, %s234
      %p240 = scmp.eq.s32.totalorder %s33, 0
      %p241 = por %p239, %p240
      %p242 = scmp.ne.s32.totalorder %s231, %s234
      %p243 = scmp.eq.s32.totalorder %s38, 1
      %p244 = por %p242, %p243
      %p245 = scmp.ne.s32.totalorder %s234, %s235
      %p246 = scmp.eq.s32.totalorder %s38, 0
      %p247 = por %p245, %p246
      %p248 = scmp.ne.s32.totalorder %s234, %s235
      %p249 = scmp.eq.s32.totalorder %s39, 1
      %p250 = por %p248, %p249
      %p252 = scmp.ne.s32.totalorder %s235, %s251
      %p253 = scmp.eq.s32.totalorder %s39, 0
      %p254 = por %p252, %p253
      %s255 = ssub.s32 %s33, %s40
      %p256 = scmp.eq.s32.totalorder %s255, 0
      %s258 = sadd.s32 %s257, 1
      %s259 = scalar_select %p256, %s257, %s258
      %p262 = pneg %p256
      %p263 = scmp.eq.s32.totalorder %s33, 1
      %p264 = por %p262, %p263
      %p265 = scmp.ne.s32.totalorder %s257, %s260
      %p266 = scmp.eq.s32.totalorder %s33, 0
      %p267 = por %p265, %p266
      %p268 = scmp.ne.s32.totalorder %s257, %s260
      %p269 = scmp.eq.s32.totalorder %s38, 1
      %p270 = por %p268, %p269
      %p271 = scmp.ne.s32.totalorder %s260, %s261
      %p272 = scmp.eq.s32.totalorder %s38, 0
      %p273 = por %p271, %p272
      %p274 = scmp.ne.s32.totalorder %s260, %s261
      %p275 = scmp.eq.s32.totalorder %s39, 1
      %p276 = por %p274, %p275
      %p278 = scmp.ne.s32.totalorder %s261, %s277
      %p279 = scmp.eq.s32.totalorder %s39, 0
      %p280 = por %p278, %p279
      %p281 = scmp.le.s32.totalorder 1, %s33
      %p282 = scmp.lt.s32.totalorder %s33, 3
      %p283 = pnand %p281, %p282
      %p284 = pneg %p283
      // Predicated region
      $region9: #{tpu_custom_call.1} parent=5 // pred_check
        _
      $region10: #{tpu_custom_call.1} parent=5 // pred_check_branch
        %286 = sbr.rel (%p283) target = $region12
      $region11: #{tpu_custom_call.1} parent=5 // pred_region
        %s287 = ssub.s32 %s33, 1
        // Predicated region
        $region13: #{tpu_custom_call.1} parent=11 // pred_check
          %p288 = pneg %p158
        $region14: #{tpu_custom_call.1} parent=11 // pred_check_branch
          %290 = sbr.rel (%p288) target = $region16
        $region15: #{tpu_custom_call.1} parent=11 // pred_region
          %s292 = ssub.s32 512, 512
          %293 = vsyncadd [#allocation10], %s292
          %s294 = sshll.u32 [#allocation11], 4
          %s295 = int_to_ptr.vmem [resolvable:$true] %s294
          %300 = dma.hbm_to_vmem [thread:$0]  %s4, 512, %s295, [#allocation10], 128, 128, 8
        $region16: #{tpu_custom_call.1} parent=11 // pred_fallthru
          _
        // Predicated region
        $region17: #{tpu_custom_call.1} parent=11 // pred_check
          %p301 = pneg %p179
        $region18: #{tpu_custom_call.1} parent=11 // pred_check_branch
          %303 = sbr.rel (%p301) target = $region20
        $region19: #{tpu_custom_call.1} parent=11 // pred_region
          %s305 = ssub.s32 512, 512
          %306 = vsyncadd [#allocation13], %s305
          %s307 = sshll.u32 [#allocation12], 4
          %s308 = int_to_ptr.vmem [resolvable:$true] %s307
          %313 = dma.hbm_to_vmem [thread:$0]  %s5, 512, %s308, [#allocation13], 128, 128, 8
        $region20: #{tpu_custom_call.1} parent=11 // pred_fallthru
          _
        // Predicated region
        $region21: #{tpu_custom_call.1} parent=11 // pred_check
          %p314 = pneg %p200
        $region22: #{tpu_custom_call.1} parent=11 // pred_check_branch
          %316 = sbr.rel (%p314) target = $region24
        $region23: #{tpu_custom_call.1} parent=11 // pred_region
          %s318 = ssub.s32 512, 512
          %319 = vsyncadd [#allocation13], %s318
          %s320 = sshll.u32 [#allocation14], 4
          %s321 = int_to_ptr.vmem [resolvable:$true] %s320
          %326 = dma.hbm_to_vmem [thread:$0]  %s6, 512, %s321, [#allocation13], 128, 128, 8
        $region24: #{tpu_custom_call.1} parent=11 // pred_fallthru
          _
        // Predicated region
        $region25: #{tpu_custom_call.1} parent=11 // pred_check
          %p327 = pneg %p221
        $region26: #{tpu_custom_call.1} parent=11 // pred_check_branch
          %329 = sbr.rel (%p327) target = $region28
        $region27: #{tpu_custom_call.1} parent=11 // pred_region
          %s331 = ssub.s32 512, 512
          %332 = vsyncadd [#allocation16], %s331
          %s333 = sshll.u32 [#allocation15], 4
          %s334 = int_to_ptr.vmem [resolvable:$true] %s333
          %339 = dma.hbm_to_vmem [thread:$0]  %s7, 512, %s334, [#allocation16], 128, 128, 8
        $region28: #{tpu_custom_call.1} parent=11 // pred_fallthru
          _
      $region12: #{tpu_custom_call.1} parent=5 // pred_fallthru
        _
      %p340 = scmp.lt.s32.totalorder %s33, 2
      // Predicated region
      $region29: #{tpu_custom_call.1} parent=5 // pred_check
        %p341 = pneg %p340
      $region30: #{tpu_custom_call.1} parent=5 // pred_check_branch
        %343 = sbr.rel (%p341) target = $region32
      $region31: #{tpu_custom_call.1} parent=5 // pred_region
        // Predicated region
        $region33: #{tpu_custom_call.1} parent=31 // pred_check
          %p344 = pneg %p53
        $region34: #{tpu_custom_call.1} parent=31 // pred_check_branch
          %346 = sbr.rel (%p344) target = $region36
        $region35: #{tpu_custom_call.1} parent=31 // pred_region
          %s347 = sand.u32 %s43, 1
          %s348 = scalar_lea.sflag [#allocation4], %s347
          %s349 = sand.u32 %s43, 1
          %s350 = smul.addr %s349, 8
          %s351 = scalar_lea.vmem [#allocation3], %s350
          %s353 = ssub.s32 128, 128
          %354 = vsyncadd %s348, %s353
          %s355 = smul.addr %s33, 128
          %s356 = scalar_lea.hbm %s0, %s355
          %s358 = sshll.u32 %s351, 4
          %s359 = int_to_ptr.vmem [resolvable:$true] %s358
          %361 = dma.hbm_to_vmem [thread:$0]  %s356, 128, %s359, %s348
        $region36: #{tpu_custom_call.1} parent=31 // pred_fallthru
          _
        // Predicated region
        $region37: #{tpu_custom_call.1} parent=31 // pred_check
          %p362 = pneg %p79
        $region38: #{tpu_custom_call.1} parent=31 // pred_check_branch
          %364 = sbr.rel (%p362) target = $region40
        $region39: #{tpu_custom_call.1} parent=31 // pred_region
          %s365 = sand.u32 %s33, 1
          %s366 = scalar_lea.sflag [#allocation7], %s365
          %s367 = sand.u32 %s69, 1
          %s368 = smul.addr %s367, 8
          %s369 = scalar_lea.vmem [#allocation6], %s368
          %s371 = ssub.s32 128, 128
          %372 = vsyncadd %s366, %s371
          %s373 = smul.addr %s33, 128
          %s374 = scalar_lea.hbm %s1, %s373
          %s376 = sshll.u32 %s369, 4
          %s377 = int_to_ptr.vmem [resolvable:$true] %s376
          %379 = dma.hbm_to_vmem [thread:$0]  %s374, 128, %s377, %s366
        $region40: #{tpu_custom_call.1} parent=31 // pred_fallthru
          _
        // Predicated region
        $region41: #{tpu_custom_call.1} parent=31 // pred_check
          %p380 = pneg %p105
        $region42: #{tpu_custom_call.1} parent=31 // pred_check_branch
          %382 = sbr.rel (%p380) target = $region44
        $region43: #{tpu_custom_call.1} parent=31 // pred_region
          %s383 = sand.u32 %s33, 1
          %s384 = scalar_lea.sflag [#allocation7], %s383
          %s385 = sand.u32 %s95, 1
          %s386 = smul.addr %s385, 8
          %s387 = scalar_lea.vmem [#allocation8], %s386
          %s389 = ssub.s32 128, 128
          %390 = vsyncadd %s384, %s389
          %s391 = smul.addr %s33, 128
          %s392 = scalar_lea.hbm %s2, %s391
          %s394 = sshll.u32 %s387, 4
          %s395 = int_to_ptr.vmem [resolvable:$true] %s394
          %397 = dma.hbm_to_vmem [thread:$0]  %s392, 128, %s395, %s384
        $region44: #{tpu_custom_call.1} parent=31 // pred_fallthru
          _
        // Predicated region
        $region45: #{tpu_custom_call.1} parent=31 // pred_check
          %p398 = pneg %p131
        $region46: #{tpu_custom_call.1} parent=31 // pred_check_branch
          %400 = sbr.rel (%p398) target = $region48
        $region47: #{tpu_custom_call.1} parent=31 // pred_region
          %s401 = sand.u32 %s33, 1
          %s402 = scalar_lea.sflag [#allocation10], %s401
          %s403 = sand.u32 %s121, 1
          %s404 = smul.addr %s403, 8
          %s405 = scalar_lea.vmem [#allocation9], %s404
          %s407 = ssub.s32 128, 128
          %408 = vsyncadd %s402, %s407
          %s409 = smul.addr %s33, 128
          %s410 = scalar_lea.hbm %s3, %s409
          %s412 = sshll.u32 %s405, 4
          %s413 = int_to_ptr.vmem [resolvable:$true] %s412
          %415 = dma.hbm_to_vmem [thread:$0]  %s410, 128, %s413, %s402
        $region48: #{tpu_custom_call.1} parent=31 // pred_fallthru
          _
      $region32: #{tpu_custom_call.1} parent=5 // pred_fallthru
        _
      %p416 = scmp.le.s32.totalorder 1, %s33
      %p417 = scmp.lt.s32.totalorder %s33, 3
      %p418 = pnand %p416, %p417
      %p419 = pneg %p418
      // Predicated region
      $region49: #{tpu_custom_call.1} parent=5 // pred_check
        _
      $region50: #{tpu_custom_call.1} parent=5 // pred_check_branch
        %421 = sbr.rel (%p418) target = $region52
      $region51: #{tpu_custom_call.1} parent=5 // pred_region
        %s422 = ssub.s32 %s33, 1
        %s423 = sand.u32 %s46, 1
        %s424 = scalar_lea.sflag [#allocation4], %s423
        %s425 = sand.u32 %s46, 1
        %s426 = smul.addr %s425, 8
        %s427 = scalar_lea.vmem [#allocation3], %s426
        // Predicated region
        $region53: #{tpu_custom_call.1} parent=51 // pred_check
          %p428 = pneg %p59
        $region54: #{tpu_custom_call.1} parent=51 // pred_check_branch
          %430 = sbr.rel (%p428) target = $region56
        $region55: #{tpu_custom_call.1} parent=51 // pred_region
          %431 = dma.done %s424, 128
        $region56: #{tpu_custom_call.1} parent=51 // pred_fallthru
          _
        %s432 = sand.u32 %s38, 1
        %s433 = scalar_lea.sflag [#allocation7], %s432
        %s434 = sand.u32 %s72, 1
        %s435 = smul.addr %s434, 8
        %s436 = scalar_lea.vmem [#allocation6], %s435
        // Predicated region
        $region57: #{tpu_custom_call.1} parent=51 // pred_check
          %p437 = pneg %p85
        $region58: #{tpu_custom_call.1} parent=51 // pred_check_branch
          %439 = sbr.rel (%p437) target = $region60
        $region59: #{tpu_custom_call.1} parent=51 // pred_region
          %440 = dma.done %s433, 128
        $region60: #{tpu_custom_call.1} parent=51 // pred_fallthru
          _
        %s441 = sand.u32 %s38, 1
        %s442 = scalar_lea.sflag [#allocation7], %s441
        %s443 = sand.u32 %s98, 1
        %s444 = smul.addr %s443, 8
        %s445 = scalar_lea.vmem [#allocation8], %s444
        // Predicated region
        $region61: #{tpu_custom_call.1} parent=51 // pred_check
          %p446 = pneg %p111
        $region62: #{tpu_custom_call.1} parent=51 // pred_check_branch
          %448 = sbr.rel (%p446) target = $region64
        $region63: #{tpu_custom_call.1} parent=51 // pred_region
          %449 = dma.done %s442, 128
        $region64: #{tpu_custom_call.1} parent=51 // pred_fallthru
          _
        %s450 = sand.u32 %s38, 1
        %s451 = scalar_lea.sflag [#allocation10], %s450
        %s452 = sand.u32 %s124, 1
        %s453 = smul.addr %s452, 8
        %s454 = scalar_lea.vmem [#allocation9], %s453
        // Predicated region
        $region65: #{tpu_custom_call.1} parent=51 // pred_check
          %p455 = pneg %p137
        $region66: #{tpu_custom_call.1} parent=51 // pred_check_branch
          %457 = sbr.rel (%p455) target = $region68
        $region67: #{tpu_custom_call.1} parent=51 // pred_region
          %458 = dma.done %s451, 128
        $region68: #{tpu_custom_call.1} parent=51 // pred_fallthru
          _
        // Predicated region
        $region69: #{tpu_custom_call.1} parent=51 // pred_check
          %p459 = pneg %p158
        $region70: #{tpu_custom_call.1} parent=51 // pred_check_branch
          %461 = sbr.rel (%p459) target = $region72
        $region71: #{tpu_custom_call.1} parent=51 // pred_region
          %462 = dma.done [#allocation10], 512
        $region72: #{tpu_custom_call.1} parent=51 // pred_fallthru
          _
        // Predicated region
        $region73: #{tpu_custom_call.1} parent=51 // pred_check
          %p463 = pneg %p179
        $region74: #{tpu_custom_call.1} parent=51 // pred_check_branch
          %465 = sbr.rel (%p463) target = $region76
        $region75: #{tpu_custom_call.1} parent=51 // pred_region
          %466 = dma.done [#allocation13], 512
        $region76: #{tpu_custom_call.1} parent=51 // pred_fallthru
          _
        // Predicated region
        $region77: #{tpu_custom_call.1} parent=51 // pred_check
          %p467 = pneg %p200
        $region78: #{tpu_custom_call.1} parent=51 // pred_check_branch
          %469 = sbr.rel (%p467) target = $region80
        $region79: #{tpu_custom_call.1} parent=51 // pred_region
          %470 = dma.done [#allocation13], 512
        $region80: #{tpu_custom_call.1} parent=51 // pred_fallthru
          _
        // Predicated region
        $region81: #{tpu_custom_call.1} parent=51 // pred_check
          %p471 = pneg %p221
        $region82: #{tpu_custom_call.1} parent=51 // pred_check_branch
          %473 = sbr.rel (%p471) target = $region84
        $region83: #{tpu_custom_call.1} parent=51 // pred_region
          %474 = dma.done [#allocation16], 512
        $region84: #{tpu_custom_call.1} parent=51 // pred_fallthru
          _
        %s475 = sand.u32 %s46, 1
        %s476 = scalar_lea.sflag [#allocation4], %s475
        %s477 = sand.u32 %s46, 1
        %s478 = smul.addr %s477, 8
        %s479 = scalar_lea.vmem [#allocation3], %s478
        %p480 = pneg %p59
        %p481 = pneg %p56
        %s482 = sand.u32 %s38, 1
        %s483 = scalar_lea.sflag [#allocation7], %s482
        %s484 = sand.u32 %s72, 1
        %s485 = smul.addr %s484, 8
        %s486 = scalar_lea.vmem [#allocation6], %s485
        %p487 = pneg %p85
        %p488 = pneg %p82
        %s489 = sand.u32 %s38, 1
        %s490 = scalar_lea.sflag [#allocation7], %s489
        %s491 = sand.u32 %s98, 1
        %s492 = smul.addr %s491, 8
        %s493 = scalar_lea.vmem [#allocation8], %s492
        %p494 = pneg %p111
        %p495 = pneg %p108
        %s496 = sand.u32 %s38, 1
        %s497 = scalar_lea.sflag [#allocation10], %s496
        %s498 = sand.u32 %s124, 1
        %s499 = smul.addr %s498, 8
        %s500 = scalar_lea.vmem [#allocation9], %s499
        %p501 = pneg %p137
        %p502 = pneg %p134
        %p503 = pneg %p158
        %p504 = pneg %p155
        %p505 = pneg %p179
        %p506 = pneg %p176
        %p507 = pneg %p200
        %p508 = pneg %p197
        %p509 = pneg %p221
        %p510 = pneg %p218
        %p511 = pneg %p247
        %p512 = pneg %p244
        %s513 = sand.u32 %s234, 1
        %s514 = scalar_lea.sflag [#allocation5], %s513
        %s515 = sand.u32 %s234, 1
        %s516 = smul.addr %s515, 8
        %s517 = scalar_lea.vmem [#allocation17], %s516
        %p518 = pneg %p273
        %p519 = pneg %p270
        %s520 = sand.u32 %s260, 1
        %s521 = scalar_lea.sflag [#allocation19], %s520
        %s522 = sand.u32 %s260, 1
        %s523 = smul.addr %s522, 32
        %s524 = scalar_lea.vmem [#allocation18], %s523
        %v525 = vld [vmem:[%s427] sm:$0xff]
        %v526 = vld [vmem:[%s436] sm:$0xff]
        %v527 = vld [vmem:[%s445] sm:$0xff]
        %v528 = vld [vmem:[%s454] sm:$0xff]
        %v529 = vld [vmem:[#allocation11] sm:$0xff]
        %v530 = vld [vmem:[#allocation11 + $0x8] sm:$0xff]
        %v531 = vld [vmem:[#allocation11 + $0x10] sm:$0xff]
        %v532 = vld [vmem:[#allocation11 + $0x18] sm:$0xff]
        %vm533 = vcmask 261120
        %v535 = vsel %vm533, %v525, 0
        %v538 = vsel %vm533, %v529, 0
        %v541 = vsel %vm533, %v530, 0
        %v544 = vsel %vm533, %v531, 0
        %v547 = vsel %vm533, %v532, 0
        %549 = vmatprep.subr.mxu0 0.0
        %550 = vmatpush1.xpose.msra.mxu0 %v538
        %551 = vmatprep.subr.mxu0 0.0
        %552 = vmatpush1.xpose.msra.mxu0 %v541
        %553 = vmatprep.subr.mxu0 0.0
        %554 = vmatpush1.xpose.msra.mxu0 %v544
        %555 = vmatprep.subr.mxu0 0.0
        %556 = vmatpush1.xpose.msra.mxu0 %v547
        %557 = vmatprep.subr.mxu0 0.0
        %558 = vmatpush1.xpose.msra.mxu0 0.0
        %559 = vmatprep.subr.mxu0 0.0
        %560 = vmatpush1.xpose.msra.mxu0 0.0
        %561 = vmatprep.subr.mxu0 0.0
        %562 = vmatpush1.xpose.msra.mxu0 0.0
        %563 = vmatprep.subr.mxu0 0.0
        %564 = vmatpush1.xpose.msra.mxu0 0.0
        %565 = vmatprep.subr.mxu0 0.0
        %566 = vmatpush1.xpose.msra.mxu0 0.0
        %567 = vmatprep.subr.mxu0 0.0
        %568 = vmatpush1.xpose.msra.mxu0 0.0
        %569 = vmatprep.subr.mxu0 0.0
        %570 = vmatpush1.xpose.msra.mxu0 0.0
        %571 = vmatprep.subr.mxu0 0.0
        %572 = vmatpush1.xpose.msra.mxu0 0.0
        %573 = vmatprep.subr.mxu0 0.0
        %574 = vmatpush1.xpose.msra.mxu0 0.0
        %575 = vmatprep.subr.mxu0 0.0
        %576 = vmatpush1.xpose.msra.mxu0 0.0
        %577 = vmatprep.subr.mxu0 0.0
        %578 = vmatpush1.xpose.msra.mxu0 0.0
        %579 = vmatprep.subr.mxu0 0.0
        %580 = vmatpush1.xpose.msra.mxu0 0.0
        %581 = vmatprep.subr.mxu0 0.0
        %582 = vmatpush1.xpose.msra.mxu0 0.0
        %583 = vmatprep.subr.mxu0 0.0
        %584 = vmatpush1.xpose.msra.mxu0 0.0
        %585 = vmatprep.subr.mxu0 0.0
        %586 = vmatpush1.xpose.msra.mxu0 0.0
        %587 = vmatprep.subr.mxu0 0.0
        %588 = vmatpush1.xpose.msra.mxu0 0.0
        %589 = vmatprep.subr.mxu0 0.0
        %590 = vmatpush1.xpose.msra.mxu0 0.0
        %591 = vmatprep.subr.mxu0 0.0
        %592 = vmatpush1.xpose.msra.mxu0 0.0
        %593 = vmatprep.subr.mxu0 0.0
        %594 = vmatpush1.xpose.msra.mxu0 0.0
        %595 = vmatprep.subr.mxu0 0.0
        %596 = vmatpush1.xpose.msra.mxu0 0.0
        %597 = vmatprep.subr.mxu0 0.0
        %598 = vmatpush1.xpose.msra.mxu0 0.0
        %599 = vmatprep.subr.mxu0 0.0
        %600 = vmatpush1.xpose.msra.mxu0 0.0
        %601 = vmatprep.subr.mxu0 0.0
        %602 = vmatpush1.xpose.msra.mxu0 0.0
        %603 = vmatprep.subr.mxu0 0.0
        %604 = vmatpush1.xpose.msra.mxu0 0.0
        %605 = vmatprep.subr.mxu0 0.0
        %606 = vmatpush1.xpose.msra.mxu0 0.0
        %607 = vmatprep.subr.mxu0 0.0
        %608 = vmatpush1.xpose.msra.mxu0 0.0
        %609 = vmatprep.subr.mxu0 0.0
        %610 = vmatpush1.xpose.msra.mxu0 0.0
        %611 = vmatprep.subr.mxu0 0.0
        %612 = vmatpush1.xpose.msra.mxu0 0.0
        %613 = vmatprep.mubr.f32.mxu0 0.0
        %614 = vmatmul.mubr.f32.gmra.mrb[0].mxu0 %v535
        %v615 = vpop.f32.mrb[0].mxu0
        %v616 = vadd.f32 0.0, %v615
        %v617 = vpop.f32.mrb[0].mxu0
        %618 = vdwg.mxu0
        %v619 = vld [vmem:[#allocation12] sm:$0xff]
        %v620 = vld [vmem:[#allocation12 + $0x8] sm:$0xff]
        %v621 = vld [vmem:[#allocation12 + $0x10] sm:$0xff]
        %v622 = vld [vmem:[#allocation12 + $0x18] sm:$0xff]
        %v624 = vsel %vm533, %v526, 0
        %v627 = vsel %vm533, %v619, 0
        %v630 = vsel %vm533, %v620, 0
        %v633 = vsel %vm533, %v621, 0
        %v636 = vsel %vm533, %v622, 0
        %638 = vmatprep.subr.mxu0 0.0
        %639 = vmatpush1.xpose.msra.mxu0 %v627
        %640 = vmatprep.subr.mxu0 0.0
        %641 = vmatpush1.xpose.msra.mxu0 %v630
        %642 = vmatprep.subr.mxu0 0.0
        %643 = vmatpush1.xpose.msra.mxu0 %v633
        %644 = vmatprep.subr.mxu0 0.0
        %645 = vmatpush1.xpose.msra.mxu0 %v636
        %646 = vmatprep.subr.mxu0 0.0
        %647 = vmatpush1.xpose.msra.mxu0 0.0
        %648 = vmatprep.subr.mxu0 0.0
        %649 = vmatpush1.xpose.msra.mxu0 0.0
        %650 = vmatprep.subr.mxu0 0.0
        %651 = vmatpush1.xpose.msra.mxu0 0.0
        %652 = vmatprep.subr.mxu0 0.0
        %653 = vmatpush1.xpose.msra.mxu0 0.0
        %654 = vmatprep.subr.mxu0 0.0
        %655 = vmatpush1.xpose.msra.mxu0 0.0
        %656 = vmatprep.subr.mxu0 0.0
        %657 = vmatpush1.xpose.msra.mxu0 0.0
        %658 = vmatprep.subr.mxu0 0.0
        %659 = vmatpush1.xpose.msra.mxu0 0.0
        %660 = vmatprep.subr.mxu0 0.0
        %661 = vmatpush1.xpose.msra.mxu0 0.0
        %662 = vmatprep.subr.mxu0 0.0
        %663 = vmatpush1.xpose.msra.mxu0 0.0
        %664 = vmatprep.subr.mxu0 0.0
        %665 = vmatpush1.xpose.msra.mxu0 0.0
        %666 = vmatprep.subr.mxu0 0.0
        %667 = vmatpush1.xpose.msra.mxu0 0.0
        %668 = vmatprep.subr.mxu0 0.0
        %669 = vmatpush1.xpose.msra.mxu0 0.0
        %670 = vmatprep.subr.mxu0 0.0
        %671 = vmatpush1.xpose.msra.mxu0 0.0
        %672 = vmatprep.subr.mxu0 0.0
        %673 = vmatpush1.xpose.msra.mxu0 0.0
        %674 = vmatprep.subr.mxu0 0.0
        %675 = vmatpush1.xpose.msra.mxu0 0.0
        %676 = vmatprep.subr.mxu0 0.0
        %677 = vmatpush1.xpose.msra.mxu0 0.0
        %678 = vmatprep.subr.mxu0 0.0
        %679 = vmatpush1.xpose.msra.mxu0 0.0
        %680 = vmatprep.subr.mxu0 0.0
        %681 = vmatpush1.xpose.msra.mxu0 0.0
        %682 = vmatprep.subr.mxu0 0.0
        %683 = vmatpush1.xpose.msra.mxu0 0.0
        %684 = vmatprep.subr.mxu0 0.0
        %685 = vmatpush1.xpose.msra.mxu0 0.0
        %686 = vmatprep.subr.mxu0 0.0
        %687 = vmatpush1.xpose.msra.mxu0 0.0
        %688 = vmatprep.subr.mxu0 0.0
        %689 = vmatpush1.xpose.msra.mxu0 0.0
        %690 = vmatprep.subr.mxu0 0.0
        %691 = vmatpush1.xpose.msra.mxu0 0.0
        %692 = vmatprep.subr.mxu0 0.0
        %693 = vmatpush1.xpose.msra.mxu0 0.0
        %694 = vmatprep.subr.mxu0 0.0
        %695 = vmatpush1.xpose.msra.mxu0 0.0
        %696 = vmatprep.subr.mxu0 0.0
        %697 = vmatpush1.xpose.msra.mxu0 0.0
        %698 = vmatprep.subr.mxu0 0.0
        %699 = vmatpush1.xpose.msra.mxu0 0.0
        %700 = vmatprep.subr.mxu0 0.0
        %701 = vmatpush1.xpose.msra.mxu0 0.0
        %702 = vmatprep.mubr.f32.mxu0 0.0
        %703 = vmatmul.mubr.f32.gmra.mrb[0].mxu0 %v624
        %v704 = vpop.f32.mrb[0].mxu0
        %v705 = vadd.f32 0.0, %v704
        %v706 = vpop.f32.mrb[0].mxu0
        %707 = vdwg.mxu0
        %v708 = vld [vmem:[#allocation14] sm:$0xff]
        %v709 = vld [vmem:[#allocation14 + $0x8] sm:$0xff]
        %v710 = vld [vmem:[#allocation14 + $0x10] sm:$0xff]
        %v711 = vld [vmem:[#allocation14 + $0x18] sm:$0xff]
        %v713 = vsel %vm533, %v527, 0
        %v716 = vsel %vm533, %v708, 0
        %v719 = vsel %vm533, %v709, 0
        %v722 = vsel %vm533, %v710, 0
        %v725 = vsel %vm533, %v711, 0
        %727 = vmatprep.subr.mxu0 0.0
        %728 = vmatpush1.xpose.msra.mxu0 %v716
        %729 = vmatprep.subr.mxu0 0.0
        %730 = vmatpush1.xpose.msra.mxu0 %v719
        %731 = vmatprep.subr.mxu0 0.0
        %732 = vmatpush1.xpose.msra.mxu0 %v722
        %733 = vmatprep.subr.mxu0 0.0
        %734 = vmatpush1.xpose.msra.mxu0 %v725
        %735 = vmatprep.subr.mxu0 0.0
        %736 = vmatpush1.xpose.msra.mxu0 0.0
        %737 = vmatprep.subr.mxu0 0.0
        %738 = vmatpush1.xpose.msra.mxu0 0.0
        %739 = vmatprep.subr.mxu0 0.0
        %740 = vmatpush1.xpose.msra.mxu0 0.0
        %741 = vmatprep.subr.mxu0 0.0
        %742 = vmatpush1.xpose.msra.mxu0 0.0
        %743 = vmatprep.subr.mxu0 0.0
        %744 = vmatpush1.xpose.msra.mxu0 0.0
        %745 = vmatprep.subr.mxu0 0.0
        %746 = vmatpush1.xpose.msra.mxu0 0.0
        %747 = vmatprep.subr.mxu0 0.0
        %748 = vmatpush1.xpose.msra.mxu0 0.0
        %749 = vmatprep.subr.mxu0 0.0
        %750 = vmatpush1.xpose.msra.mxu0 0.0
        %751 = vmatprep.subr.mxu0 0.0
        %752 = vmatpush1.xpose.msra.mxu0 0.0
        %753 = vmatprep.subr.mxu0 0.0
        %754 = vmatpush1.xpose.msra.mxu0 0.0
        %755 = vmatprep.subr.mxu0 0.0
        %756 = vmatpush1.xpose.msra.mxu0 0.0
        %757 = vmatprep.subr.mxu0 0.0
        %758 = vmatpush1.xpose.msra.mxu0 0.0
        %759 = vmatprep.subr.mxu0 0.0
        %760 = vmatpush1.xpose.msra.mxu0 0.0
        %761 = vmatprep.subr.mxu0 0.0
        %762 = vmatpush1.xpose.msra.mxu0 0.0
        %763 = vmatprep.subr.mxu0 0.0
        %764 = vmatpush1.xpose.msra.mxu0 0.0
        %765 = vmatprep.subr.mxu0 0.0
        %766 = vmatpush1.xpose.msra.mxu0 0.0
        %767 = vmatprep.subr.mxu0 0.0
        %768 = vmatpush1.xpose.msra.mxu0 0.0
        %769 = vmatprep.subr.mxu0 0.0
        %770 = vmatpush1.xpose.msra.mxu0 0.0
        %771 = vmatprep.subr.mxu0 0.0
        %772 = vmatpush1.xpose.msra.mxu0 0.0
        %773 = vmatprep.subr.mxu0 0.0
        %774 = vmatpush1.xpose.msra.mxu0 0.0
        %775 = vmatprep.subr.mxu0 0.0
        %776 = vmatpush1.xpose.msra.mxu0 0.0
        %777 = vmatprep.subr.mxu0 0.0
        %778 = vmatpush1.xpose.msra.mxu0 0.0
        %779 = vmatprep.subr.mxu0 0.0
        %780 = vmatpush1.xpose.msra.mxu0 0.0
        %781 = vmatprep.subr.mxu0 0.0
        %782 = vmatpush1.xpose.msra.mxu0 0.0
        %783 = vmatprep.subr.mxu0 0.0
        %784 = vmatpush1.xpose.msra.mxu0 0.0
        %785 = vmatprep.subr.mxu0 0.0
        %786 = vmatpush1.xpose.msra.mxu0 0.0
        %787 = vmatprep.subr.mxu0 0.0
        %788 = vmatpush1.xpose.msra.mxu0 0.0
        %789 = vmatprep.subr.mxu0 0.0
        %790 = vmatpush1.xpose.msra.mxu0 0.0
        %791 = vmatprep.mubr.f32.mxu0 0.0
        %792 = vmatmul.mubr.f32.gmra.mrb[0].mxu0 %v713
        %v793 = vpop.f32.mrb[0].mxu0
        %v794 = vadd.f32 0.0, %v793
        %v795 = vpop.f32.mrb[0].mxu0
        %796 = vdwg.mxu0
        %vm797 = vcmp.ne.s32.totalorder %v528, 0
        %vm798 = vcmask 64512
        %v800 = vsel %vm798, %v616, 0
        %v803 = vsel %vm798, %v705, 0
        %805 = vmatprep.subr.mxu0 0.0
        %806 = vmatpush1.xpose.msra.mxu0 %v803
        %807 = vmatprep.subr.mxu0 0.0
        %808 = vmatpush1.xpose.msra.mxu0 0.0
        %809 = vmatprep.subr.mxu0 0.0
        %810 = vmatpush1.xpose.msra.mxu0 0.0
        %811 = vmatprep.subr.mxu0 0.0
        %812 = vmatpush1.xpose.msra.mxu0 0.0
        %813 = vmatprep.subr.mxu0 0.0
        %814 = vmatpush1.xpose.msra.mxu0 0.0
        %815 = vmatprep.subr.mxu0 0.0
        %816 = vmatpush1.xpose.msra.mxu0 0.0
        %817 = vmatprep.subr.mxu0 0.0
        %818 = vmatpush1.xpose.msra.mxu0 0.0
        %819 = vmatprep.subr.mxu0 0.0
        %820 = vmatpush1.xpose.msra.mxu0 0.0
        %821 = vmatprep.subr.mxu0 0.0
        %822 = vmatpush1.xpose.msra.mxu0 0.0
        %823 = vmatprep.subr.mxu0 0.0
        %824 = vmatpush1.xpose.msra.mxu0 0.0
        %825 = vmatprep.subr.mxu0 0.0
        %826 = vmatpush1.xpose.msra.mxu0 0.0
        %827 = vmatprep.subr.mxu0 0.0
        %828 = vmatpush1.xpose.msra.mxu0 0.0
        %829 = vmatprep.subr.mxu0 0.0
        %830 = vmatpush1.xpose.msra.mxu0 0.0
        %831 = vmatprep.subr.mxu0 0.0
        %832 = vmatpush1.xpose.msra.mxu0 0.0
        %833 = vmatprep.subr.mxu0 0.0
        %834 = vmatpush1.xpose.msra.mxu0 0.0
        %835 = vmatprep.subr.mxu0 0.0
        %836 = vmatpush1.xpose.msra.mxu0 0.0
        %837 = vmatprep.subr.mxu0 0.0
        %838 = vmatpush1.xpose.msra.mxu0 0.0
        %839 = vmatprep.subr.mxu0 0.0
        %840 = vmatpush1.xpose.msra.mxu0 0.0
        %841 = vmatprep.subr.mxu0 0.0
        %842 = vmatpush1.xpose.msra.mxu0 0.0
        %843 = vmatprep.subr.mxu0 0.0
        %844 = vmatpush1.xpose.msra.mxu0 0.0
        %845 = vmatprep.subr.mxu0 0.0
        %846 = vmatpush1.xpose.msra.mxu0 0.0
        %847 = vmatprep.subr.mxu0 0.0
        %848 = vmatpush1.xpose.msra.mxu0 0.0
        %849 = vmatprep.subr.mxu0 0.0
        %850 = vmatpush1.xpose.msra.mxu0 0.0
        %851 = vmatprep.subr.mxu0 0.0
        %852 = vmatpush1.xpose.msra.mxu0 0.0
        %853 = vmatprep.subr.mxu0 0.0
        %854 = vmatpush1.xpose.msra.mxu0 0.0
        %855 = vmatprep.subr.mxu0 0.0
        %856 = vmatpush1.xpose.msra.mxu0 0.0
        %857 = vmatprep.subr.mxu0 0.0
        %858 = vmatpush1.xpose.msra.mxu0 0.0
        %859 = vmatprep.subr.mxu0 0.0
        %860 = vmatpush1.xpose.msra.mxu0 0.0
        %861 = vmatprep.subr.mxu0 0.0
        %862 = vmatpush1.xpose.msra.mxu0 0.0
        %863 = vmatprep.subr.mxu0 0.0
        %864 = vmatpush1.xpose.msra.mxu0 0.0
        %865 = vmatprep.subr.mxu0 0.0
        %866 = vmatpush1.xpose.msra.mxu0 0.0
        %867 = vmatprep.subr.mxu0 0.0
        %868 = vmatpush1.xpose.msra.mxu0 0.0
        %869 = vmatprep.mubr.f32.mxu0 0.0
        %870 = vmatmul.mubr.f32.gmra.mrb[0].mxu0 %v800
        %v871 = vpop.f32.mrb[0].mxu0
        %v872 = vadd.f32 0.0, %v871
        %v873 = vpop.f32.mrb[0].mxu0
        %874 = vdwg.mxu0
        %v875 = vmul.f32 %v872, 0.35355338
        %v876 = vsel %vm797, -1e+09, %v875
        %v877 = vsel %vm798, %v876, -inf
        %878 = vmax.xlane.f32.xlu0 %v877
        %v879 = vpop.xlane.xlu0 %878
        %v880 = vsub.f32 %v876, %v879
        %v881 = vmul.f32 %v880, 1.442695
        %v882 = vpow.pop %v881
        %v883 = vsel %vm798, %v882, 0.0
        %884 = vadd.xlane.f32.xlu0 %v883
        %v885 = vpop.xlane.xlu0 %884
        %v886 = vrcp.pop %v885
        %v887 = vmul.f32 %v882, %v886
        %v889 = vsel %vm798, %v887, 0
        %891 = vmatprep.subr.mxu0 0.0
        %892 = vmatpush1.msra.mxu0 %v794
        %893 = vmatprep.subr.mxu0 0.0
        %894 = vmatpush1.msra.mxu0 0.0
        %895 = vmatprep.subr.mxu0 0.0
        %896 = vmatpush1.msra.mxu0 0.0
        %897 = vmatprep.subr.mxu0 0.0
        %898 = vmatpush1.msra.mxu0 0.0
        %899 = vmatprep.subr.mxu0 0.0
        %900 = vmatpush1.msra.mxu0 0.0
        %901 = vmatprep.subr.mxu0 0.0
        %902 = vmatpush1.msra.mxu0 0.0
        %903 = vmatprep.subr.mxu0 0.0
        %904 = vmatpush1.msra.mxu0 0.0
        %905 = vmatprep.subr.mxu0 0.0
        %906 = vmatpush1.msra.mxu0 0.0
        %907 = vmatprep.subr.mxu0 0.0
        %908 = vmatpush1.msra.mxu0 0.0
        %909 = vmatprep.subr.mxu0 0.0
        %910 = vmatpush1.msra.mxu0 0.0
        %911 = vmatprep.subr.mxu0 0.0
        %912 = vmatpush1.msra.mxu0 0.0
        %913 = vmatprep.subr.mxu0 0.0
        %914 = vmatpush1.msra.mxu0 0.0
        %915 = vmatprep.subr.mxu0 0.0
        %916 = vmatpush1.msra.mxu0 0.0
        %917 = vmatprep.subr.mxu0 0.0
        %918 = vmatpush1.msra.mxu0 0.0
        %919 = vmatprep.subr.mxu0 0.0
        %920 = vmatpush1.msra.mxu0 0.0
        %921 = vmatprep.subr.mxu0 0.0
        %922 = vmatpush1.msra.mxu0 0.0
        %923 = vmatprep.subr.mxu0 0.0
        %924 = vmatpush1.msra.mxu0 0.0
        %925 = vmatprep.subr.mxu0 0.0
        %926 = vmatpush1.msra.mxu0 0.0
        %927 = vmatprep.subr.mxu0 0.0
        %928 = vmatpush1.msra.mxu0 0.0
        %929 = vmatprep.subr.mxu0 0.0
        %930 = vmatpush1.msra.mxu0 0.0
        %931 = vmatprep.subr.mxu0 0.0
        %932 = vmatpush1.msra.mxu0 0.0
        %933 = vmatprep.subr.mxu0 0.0
        %934 = vmatpush1.msra.mxu0 0.0
        %935 = vmatprep.subr.mxu0 0.0
        %936 = vmatpush1.msra.mxu0 0.0
        %937 = vmatprep.subr.mxu0 0.0
        %938 = vmatpush1.msra.mxu0 0.0
        %939 = vmatprep.subr.mxu0 0.0
        %940 = vmatpush1.msra.mxu0 0.0
        %941 = vmatprep.subr.mxu0 0.0
        %942 = vmatpush1.msra.mxu0 0.0
        %943 = vmatprep.subr.mxu0 0.0
        %944 = vmatpush1.msra.mxu0 0.0
        %945 = vmatprep.subr.mxu0 0.0
        %946 = vmatpush1.msra.mxu0 0.0
        %947 = vmatprep.subr.mxu0 0.0
        %948 = vmatpush1.msra.mxu0 0.0
        %949 = vmatprep.subr.mxu0 0.0
        %950 = vmatpush1.msra.mxu0 0.0
        %951 = vmatprep.subr.mxu0 0.0
        %952 = vmatpush1.msra.mxu0 0.0
        %953 = vmatprep.subr.mxu0 0.0
        %954 = vmatpush1.msra.mxu0 0.0
        %955 = vmatprep.mubr.f32.mxu0 0.0
        %956 = vmatmul.mubr.f32.gmra.mrb[0].mxu0 %v889
        %v957 = vpop.f32.mrb[0].mxu0
        %v958 = vadd.f32 0.0, %v957
        %v959 = vpop.f32.mrb[0].mxu0
        %960 = vdwg.mxu0
        %961 = vst.msk [vmem:[%s524] sm:$0xff] %vm798, %v887
        %962 = vst.msk [vmem:[#allocation2] sm:$0xff] %vm798, %v958
        %963 = vrot.lane.b32.xlu0 %v616, 120
        %v964 = vpop.permute.xlu0 %963
        %965 = vrot.lane.b32.xlu0 %v705, 120
        %v966 = vpop.permute.xlu0 %965
        %v967 = vsel %vm798, %v964, 0
        %v969 = vsel %vm798, %v966, 0
        %971 = vmatprep.subr.mxu0 0.0
        %972 = vmatpush1.xpose.msra.mxu0 %v969
        %973 = vmatprep.subr.mxu0 0.0
        %974 = vmatpush1.xpose.msra.mxu0 0.0
        %975 = vmatprep.subr.mxu0 0.0
        %976 = vmatpush1.xpose.msra.mxu0 0.0
        %977 = vmatprep.subr.mxu0 0.0
        %978 = vmatpush1.xpose.msra.mxu0 0.0
        %979 = vmatprep.subr.mxu0 0.0
        %980 = vmatpush1.xpose.msra.mxu0 0.0
        %981 = vmatprep.subr.mxu0 0.0
        %982 = vmatpush1.xpose.msra.mxu0 0.0
        %983 = vmatprep.subr.mxu0 0.0
        %984 = vmatpush1.xpose.msra.mxu0 0.0
        %985 = vmatprep.subr.mxu0 0.0
        %986 = vmatpush1.xpose.msra.mxu0 0.0
        %987 = vmatprep.subr.mxu0 0.0
        %988 = vmatpush1.xpose.msra.mxu0 0.0
        %989 = vmatprep.subr.mxu0 0.0
        %990 = vmatpush1.xpose.msra.mxu0 0.0
        %991 = vmatprep.subr.mxu0 0.0
        %992 = vmatpush1.xpose.msra.mxu0 0.0
        %993 = vmatprep.subr.mxu0 0.0
        %994 = vmatpush1.xpose.msra.mxu0 0.0
        %995 = vmatprep.subr.mxu0 0.0
        %996 = vmatpush1.xpose.msra.mxu0 0.0
        %997 = vmatprep.subr.mxu0 0.0
        %998 = vmatpush1.xpose.msra.mxu0 0.0
        %999 = vmatprep.subr.mxu0 0.0
        %1000 = vmatpush1.xpose.msra.mxu0 0.0
        %1001 = vmatprep.subr.mxu0 0.0
        %1002 = vmatpush1.xpose.msra.mxu0 0.0
        %1003 = vmatprep.subr.mxu0 0.0
        %1004 = vmatpush1.xpose.msra.mxu0 0.0
        %1005 = vmatprep.subr.mxu0 0.0
        %1006 = vmatpush1.xpose.msra.mxu0 0.0
        %1007 = vmatprep.subr.mxu0 0.0
        %1008 = vmatpush1.xpose.msra.mxu0 0.0
        %1009 = vmatprep.subr.mxu0 0.0
        %1010 = vmatpush1.xpose.msra.mxu0 0.0
        %1011 = vmatprep.subr.mxu0 0.0
        %1012 = vmatpush1.xpose.msra.mxu0 0.0
        %1013 = vmatprep.subr.mxu0 0.0
        %1014 = vmatpush1.xpose.msra.mxu0 0.0
        %1015 = vmatprep.subr.mxu0 0.0
        %1016 = vmatpush1.xpose.msra.mxu0 0.0
        %1017 = vmatprep.subr.mxu0 0.0
        %1018 = vmatpush1.xpose.msra.mxu0 0.0
        %1019 = vmatprep.subr.mxu0 0.0
        %1020 = vmatpush1.xpose.msra.mxu0 0.0
        %1021 = vmatprep.subr.mxu0 0.0
        %1022 = vmatpush1.xpose.msra.mxu0 0.0
        %1023 = vmatprep.subr.mxu0 0.0
        %1024 = vmatpush1.xpose.msra.mxu0 0.0
        %1025 = vmatprep.subr.mxu0 0.0
        %1026 = vmatpush1.xpose.msra.mxu0 0.0
        %1027 = vmatprep.subr.mxu0 0.0
        %1028 = vmatpush1.xpose.msra.mxu0 0.0
        %1029 = vmatprep.subr.mxu0 0.0
        %1030 = vmatpush1.xpose.msra.mxu0 0.0
        %1031 = vmatprep.subr.mxu0 0.0
        %1032 = vmatpush1.xpose.msra.mxu0 0.0
        %1033 = vmatprep.subr.mxu0 0.0
        %1034 = vmatpush1.xpose.msra.mxu0 0.0
        %1035 = vmatprep.mubr.f32.mxu0 0.0
        %1036 = vmatmul.mubr.f32.gmra.mrb[0].mxu0 %v967
        %v1037 = vpop.f32.mrb[0].mxu0
        %v1038 = vadd.f32 0.0, %v1037
        %v1039 = vpop.f32.mrb[0].mxu0
        %1040 = vdwg.mxu0
        %v1041 = vmul.f32 %v1038, 0.35355338
        %v1042 = vsel %vm797, -1e+09, %v1041
        %v1043 = vsel %vm798, %v1042, -inf
        %1044 = vmax.xlane.f32.xlu0 %v1043
        %v1045 = vpop.xlane.xlu0 %1044
        %v1046 = vsub.f32 %v1042, %v1045
        %v1047 = vmul.f32 %v1046, 1.442695
        %v1048 = vpow.pop %v1047
        %v1049 = vsel %vm798, %v1048, 0.0
        %1050 = vadd.xlane.f32.xlu0 %v1049
        %v1051 = vpop.xlane.xlu0 %1050
        %v1052 = vrcp.pop %v1051
        %v1053 = vmul.f32 %v1048, %v1052
        %1055 = vrot.lane.b32.xlu0 %v794, 120
        %v1056 = vpop.permute.xlu0 %1055
        %v1059 = vsel %vm798, %v1053, 0
        %1061 = vmatprep.subr.mxu0 0.0
        %1062 = vmatpush1.msra.mxu0 %v1056
        %1063 = vmatprep.subr.mxu0 0.0
        %1064 = vmatpush1.msra.mxu0 0.0
        %1065 = vmatprep.subr.mxu0 0.0
        %1066 = vmatpush1.msra.mxu0 0.0
        %1067 = vmatprep.subr.mxu0 0.0
        %1068 = vmatpush1.msra.mxu0 0.0
        %1069 = vmatprep.subr.mxu0 0.0
        %1070 = vmatpush1.msra.mxu0 0.0
        %1071 = vmatprep.subr.mxu0 0.0
        %1072 = vmatpush1.msra.mxu0 0.0
        %1073 = vmatprep.subr.mxu0 0.0
        %1074 = vmatpush1.msra.mxu0 0.0
        %1075 = vmatprep.subr.mxu0 0.0
        %1076 = vmatpush1.msra.mxu0 0.0
        %1077 = vmatprep.subr.mxu0 0.0
        %1078 = vmatpush1.msra.mxu0 0.0
        %1079 = vmatprep.subr.mxu0 0.0
        %1080 = vmatpush1.msra.mxu0 0.0
        %1081 = vmatprep.subr.mxu0 0.0
        %1082 = vmatpush1.msra.mxu0 0.0
        %1083 = vmatprep.subr.mxu0 0.0
        %1084 = vmatpush1.msra.mxu0 0.0
        %1085 = vmatprep.subr.mxu0 0.0
        %1086 = vmatpush1.msra.mxu0 0.0
        %1087 = vmatprep.subr.mxu0 0.0
        %1088 = vmatpush1.msra.mxu0 0.0
        %1089 = vmatprep.subr.mxu0 0.0
        %1090 = vmatpush1.msra.mxu0 0.0
        %1091 = vmatprep.subr.mxu0 0.0
        %1092 = vmatpush1.msra.mxu0 0.0
        %1093 = vmatprep.subr.mxu0 0.0
        %1094 = vmatpush1.msra.mxu0 0.0
        %1095 = vmatprep.subr.mxu0 0.0
        %1096 = vmatpush1.msra.mxu0 0.0
        %1097 = vmatprep.subr.mxu0 0.0
        %1098 = vmatpush1.msra.mxu0 0.0
        %1099 = vmatprep.subr.mxu0 0.0
        %1100 = vmatpush1.msra.mxu0 0.0
        %1101 = vmatprep.subr.mxu0 0.0
        %1102 = vmatpush1.msra.mxu0 0.0
        %1103 = vmatprep.subr.mxu0 0.0
        %1104 = vmatpush1.msra.mxu0 0.0
        %1105 = vmatprep.subr.mxu0 0.0
        %1106 = vmatpush1.msra.mxu0 0.0
        %1107 = vmatprep.subr.mxu0 0.0
        %1108 = vmatpush1.msra.mxu0 0.0
        %1109 = vmatprep.subr.mxu0 0.0
        %1110 = vmatpush1.msra.mxu0 0.0
        %1111 = vmatprep.subr.mxu0 0.0
        %1112 = vmatpush1.msra.mxu0 0.0
        %1113 = vmatprep.subr.mxu0 0.0
        %1114 = vmatpush1.msra.mxu0 0.0
        %1115 = vmatprep.subr.mxu0 0.0
        %1116 = vmatpush1.msra.mxu0 0.0
        %1117 = vmatprep.subr.mxu0 0.0
        %1118 = vmatpush1.msra.mxu0 0.0
        %1119 = vmatprep.subr.mxu0 0.0
        %1120 = vmatpush1.msra.mxu0 0.0
        %1121 = vmatprep.subr.mxu0 0.0
        %1122 = vmatpush1.msra.mxu0 0.0
        %1123 = vmatprep.subr.mxu0 0.0
        %1124 = vmatpush1.msra.mxu0 0.0
        %1125 = vmatprep.mubr.f32.mxu0 0.0
        %1126 = vmatmul.mubr.f32.gmra.mrb[0].mxu0 %v1059
        %v1127 = vpop.f32.mrb[0].mxu0
        %v1128 = vadd.f32 0.0, %v1127
        %v1129 = vpop.f32.mrb[0].mxu0
        %1130 = vdwg.mxu0
        %s1131 = scalar_lea.vmem %s524, 8 [#allocation18]
        %1132 = vst.msk [vmem:[%s1131] sm:$0xff] %vm798, %v1053
        %1134 = vrot.lane.b32.xlu0 %v1128, 8
        %v1135 = vpop.permute.xlu0 %1134
        %vm1137 = vcmask 130112
        %1138 = vst.msk [vmem:[#allocation2] sm:$0xff] %vm1137, %v1135
        %1139 = vrot.lane.b32.xlu0 %v616, 112
        %v1140 = vpop.permute.xlu0 %1139
        %1141 = vrot.lane.b32.xlu0 %v705, 112
        %v1142 = vpop.permute.xlu0 %1141
        %v1143 = vsel %vm798, %v1140, 0
        %v1145 = vsel %vm798, %v1142, 0
        %1147 = vmatprep.subr.mxu0 0.0
        %1148 = vmatpush1.xpose.msra.mxu0 %v1145
        %1149 = vmatprep.subr.mxu0 0.0
        %1150 = vmatpush1.xpose.msra.mxu0 0.0
        %1151 = vmatprep.subr.mxu0 0.0
        %1152 = vmatpush1.xpose.msra.mxu0 0.0
        %1153 = vmatprep.subr.mxu0 0.0
        %1154 = vmatpush1.xpose.msra.mxu0 0.0
        %1155 = vmatprep.subr.mxu0 0.0
        %1156 = vmatpush1.xpose.msra.mxu0 0.0
        %1157 = vmatprep.subr.mxu0 0.0
        %1158 = vmatpush1.xpose.msra.mxu0 0.0
        %1159 = vmatprep.subr.mxu0 0.0
        %1160 = vmatpush1.xpose.msra.mxu0 0.0
        %1161 = vmatprep.subr.mxu0 0.0
        %1162 = vmatpush1.xpose.msra.mxu0 0.0
        %1163 = vmatprep.subr.mxu0 0.0
        %1164 = vmatpush1.xpose.msra.mxu0 0.0
        %1165 = vmatprep.subr.mxu0 0.0
        %1166 = vmatpush1.xpose.msra.mxu0 0.0
        %1167 = vmatprep.subr.mxu0 0.0
        %1168 = vmatpush1.xpose.msra.mxu0 0.0
        %1169 = vmatprep.subr.mxu0 0.0
        %1170 = vmatpush1.xpose.msra.mxu0 0.0
        %1171 = vmatprep.subr.mxu0 0.0
        %1172 = vmatpush1.xpose.msra.mxu0 0.0
        %1173 = vmatprep.subr.mxu0 0.0
        %1174 = vmatpush1.xpose.msra.mxu0 0.0
        %1175 = vmatprep.subr.mxu0 0.0
        %1176 = vmatpush1.xpose.msra.mxu0 0.0
        %1177 = vmatprep.subr.mxu0 0.0
        %1178 = vmatpush1.xpose.msra.mxu0 0.0
        %1179 = vmatprep.subr.mxu0 0.0
        %1180 = vmatpush1.xpose.msra.mxu0 0.0
        %1181 = vmatprep.subr.mxu0 0.0
        %1182 = vmatpush1.xpose.msra.mxu0 0.0
        %1183 = vmatprep.subr.mxu0 0.0
        %1184 = vmatpush1.xpose.msra.mxu0 0.0
        %1185 = vmatprep.subr.mxu0 0.0
        %1186 = vmatpush1.xpose.msra.mxu0 0.0
        %1187 = vmatprep.subr.mxu0 0.0
        %1188 = vmatpush1.xpose.msra.mxu0 0.0
        %1189 = vmatprep.subr.mxu0 0.0
        %1190 = vmatpush1.xpose.msra.mxu0 0.0
        %1191 = vmatprep.subr.mxu0 0.0
        %1192 = vmatpush1.xpose.msra.mxu0 0.0
        %1193 = vmatprep.subr.mxu0 0.0
        %1194 = vmatpush1.xpose.msra.mxu0 0.0
        %1195 = vmatprep.subr.mxu0 0.0
        %1196 = vmatpush1.xpose.msra.mxu0 0.0
        %1197 = vmatprep.subr.mxu0 0.0
        %1198 = vmatpush1.xpose.msra.mxu0 0.0
        %1199 = vmatprep.subr.mxu0 0.0
        %1200 = vmatpush1.xpose.msra.mxu0 0.0
        %1201 = vmatprep.subr.mxu0 0.0
        %1202 = vmatpush1.xpose.msra.mxu0 0.0
        %1203 = vmatprep.subr.mxu0 0.0
        %1204 = vmatpush1.xpose.msra.mxu0 0.0
        %1205 = vmatprep.subr.mxu0 0.0
        %1206 = vmatpush1.xpose.msra.mxu0 0.0
        %1207 = vmatprep.subr.mxu0 0.0
        %1208 = vmatpush1.xpose.msra.mxu0 0.0
        %1209 = vmatprep.subr.mxu0 0.0
        %1210 = vmatpush1.xpose.msra.mxu0 0.0
        %1211 = vmatprep.mubr.f32.mxu0 0.0
        %1212 = vmatmul.mubr.f32.gmra.mrb[0].mxu0 %v1143
        %v1213 = vpop.f32.mrb[0].mxu0
        %v1214 = vadd.f32 0.0, %v1213
        %v1215 = vpop.f32.mrb[0].mxu0
        %1216 = vdwg.mxu0
        %v1217 = vmul.f32 %v1214, 0.35355338
        %v1218 = vsel %vm797, -1e+09, %v1217
        %v1219 = vsel %vm798, %v1218, -inf
        %1220 = vmax.xlane.f32.xlu0 %v1219
        %v1221 = vpop.xlane.xlu0 %1220
        %v1222 = vsub.f32 %v1218, %v1221
        %v1223 = vmul.f32 %v1222, 1.442695
        %v1224 = vpow.pop %v1223
        %v1225 = vsel %vm798, %v1224, 0.0
        %1226 = vadd.xlane.f32.xlu0 %v1225
        %v1227 = vpop.xlane.xlu0 %1226
        %v1228 = vrcp.pop %v1227
        %v1229 = vmul.f32 %v1224, %v1228
        %1230 = vrot.lane.b32.xlu0 %v794, 112
        %v1231 = vpop.permute.xlu0 %1230
        %v1234 = vsel %vm798, %v1229, 0
        %1236 = vmatprep.subr.mxu0 0.0
        %1237 = vmatpush1.msra.mxu0 %v1231
        %1238 = vmatprep.subr.mxu0 0.0
        %1239 = vmatpush1.msra.mxu0 0.0
        %1240 = vmatprep.subr.mxu0 0.0
        %1241 = vmatpush1.msra.mxu0 0.0
        %1242 = vmatprep.subr.mxu0 0.0
        %1243 = vmatpush1.msra.mxu0 0.0
        %1244 = vmatprep.subr.mxu0 0.0
        %1245 = vmatpush1.msra.mxu0 0.0
        %1246 = vmatprep.subr.mxu0 0.0
        %1247 = vmatpush1.msra.mxu0 0.0
        %1248 = vmatprep.subr.mxu0 0.0
        %1249 = vmatpush1.msra.mxu0 0.0
        %1250 = vmatprep.subr.mxu0 0.0
        %1251 = vmatpush1.msra.mxu0 0.0
        %1252 = vmatprep.subr.mxu0 0.0
        %1253 = vmatpush1.msra.mxu0 0.0
        %1254 = vmatprep.subr.mxu0 0.0
        %1255 = vmatpush1.msra.mxu0 0.0
        %1256 = vmatprep.subr.mxu0 0.0
        %1257 = vmatpush1.msra.mxu0 0.0
        %1258 = vmatprep.subr.mxu0 0.0
        %1259 = vmatpush1.msra.mxu0 0.0
        %1260 = vmatprep.subr.mxu0 0.0
        %1261 = vmatpush1.msra.mxu0 0.0
        %1262 = vmatprep.subr.mxu0 0.0
        %1263 = vmatpush1.msra.mxu0 0.0
        %1264 = vmatprep.subr.mxu0 0.0
        %1265 = vmatpush1.msra.mxu0 0.0
        %1266 = vmatprep.subr.mxu0 0.0
        %1267 = vmatpush1.msra.mxu0 0.0
        %1268 = vmatprep.subr.mxu0 0.0
        %1269 = vmatpush1.msra.mxu0 0.0
        %1270 = vmatprep.subr.mxu0 0.0
        %1271 = vmatpush1.msra.mxu0 0.0
        %1272 = vmatprep.subr.mxu0 0.0
        %1273 = vmatpush1.msra.mxu0 0.0
        %1274 = vmatprep.subr.mxu0 0.0
        %1275 = vmatpush1.msra.mxu0 0.0
        %1276 = vmatprep.subr.mxu0 0.0
        %1277 = vmatpush1.msra.mxu0 0.0
        %1278 = vmatprep.subr.mxu0 0.0
        %1279 = vmatpush1.msra.mxu0 0.0
        %1280 = vmatprep.subr.mxu0 0.0
        %1281 = vmatpush1.msra.mxu0 0.0
        %1282 = vmatprep.subr.mxu0 0.0
        %1283 = vmatpush1.msra.mxu0 0.0
        %1284 = vmatprep.subr.mxu0 0.0
        %1285 = vmatpush1.msra.mxu0 0.0
        %1286 = vmatprep.subr.mxu0 0.0
        %1287 = vmatpush1.msra.mxu0 0.0
        %1288 = vmatprep.subr.mxu0 0.0
        %1289 = vmatpush1.msra.mxu0 0.0
        %1290 = vmatprep.subr.mxu0 0.0
        %1291 = vmatpush1.msra.mxu0 0.0
        %1292 = vmatprep.subr.mxu0 0.0
        %1293 = vmatpush1.msra.mxu0 0.0
        %1294 = vmatprep.subr.mxu0 0.0
        %1295 = vmatpush1.msra.mxu0 0.0
        %1296 = vmatprep.subr.mxu0 0.0
        %1297 = vmatpush1.msra.mxu0 0.0
        %1298 = vmatprep.subr.mxu0 0.0
        %1299 = vmatpush1.msra.mxu0 0.0
        %1300 = vmatprep.mubr.f32.mxu0 0.0
        %1301 = vmatmul.mubr.f32.gmra.mrb[0].mxu0 %v1234
        %v1302 = vpop.f32.mrb[0].mxu0
        %v1303 = vadd.f32 0.0, %v1302
        %v1304 = vpop.f32.mrb[0].mxu0
        %1305 = vdwg.mxu0
        %s1306 = scalar_lea.vmem %s524, 16 [#allocation18]
        %1307 = vst.msk [vmem:[%s1306] sm:$0xff] %vm798, %v1229
        %1309 = vrot.lane.b32.xlu0 %v1303, 16
        %v1310 = vpop.permute.xlu0 %1309
        %vm1312 = vcmask 195712
        %1313 = vst.msk [vmem:[#allocation2] sm:$0xff] %vm1312, %v1310
        %1314 = vrot.lane.b32.xlu0 %v616, 104
        %v1315 = vpop.permute.xlu0 %1314
        %1316 = vrot.lane.b32.xlu0 %v705, 104
        %v1317 = vpop.permute.xlu0 %1316
        %v1318 = vsel %vm798, %v1315, 0
        %v1320 = vsel %vm798, %v1317, 0
        %1322 = vmatprep.subr.mxu0 0.0
        %1323 = vmatpush1.xpose.msra.mxu0 %v1320
        %1324 = vmatprep.subr.mxu0 0.0
        %1325 = vmatpush1.xpose.msra.mxu0 0.0
        %1326 = vmatprep.subr.mxu0 0.0
        %1327 = vmatpush1.xpose.msra.mxu0 0.0
        %1328 = vmatprep.subr.mxu0 0.0
        %1329 = vmatpush1.xpose.msra.mxu0 0.0
        %1330 = vmatprep.subr.mxu0 0.0
        %1331 = vmatpush1.xpose.msra.mxu0 0.0
        %1332 = vmatprep.subr.mxu0 0.0
        %1333 = vmatpush1.xpose.msra.mxu0 0.0
        %1334 = vmatprep.subr.mxu0 0.0
        %1335 = vmatpush1.xpose.msra.mxu0 0.0
        %1336 = vmatprep.subr.mxu0 0.0
        %1337 = vmatpush1.xpose.msra.mxu0 0.0
        %1338 = vmatprep.subr.mxu0 0.0
        %1339 = vmatpush1.xpose.msra.mxu0 0.0
        %1340 = vmatprep.subr.mxu0 0.0
        %1341 = vmatpush1.xpose.msra.mxu0 0.0
        %1342 = vmatprep.subr.mxu0 0.0
        %1343 = vmatpush1.xpose.msra.mxu0 0.0
        %1344 = vmatprep.subr.mxu0 0.0
        %1345 = vmatpush1.xpose.msra.mxu0 0.0
        %1346 = vmatprep.subr.mxu0 0.0
        %1347 = vmatpush1.xpose.msra.mxu0 0.0
        %1348 = vmatprep.subr.mxu0 0.0
        %1349 = vmatpush1.xpose.msra.mxu0 0.0
        %1350 = vmatprep.subr.mxu0 0.0
        %1351 = vmatpush1.xpose.msra.mxu0 0.0
        %1352 = vmatprep.subr.mxu0 0.0
        %1353 = vmatpush1.xpose.msra.mxu0 0.0
        %1354 = vmatprep.subr.mxu0 0.0
        %1355 = vmatpush1.xpose.msra.mxu0 0.0
        %1356 = vmatprep.subr.mxu0 0.0
        %1357 = vmatpush1.xpose.msra.mxu0 0.0
        %1358 = vmatprep.subr.mxu0 0.0
        %1359 = vmatpush1.xpose.msra.mxu0 0.0
        %1360 = vmatprep.subr.mxu0 0.0
        %1361 = vmatpush1.xpose.msra.mxu0 0.0
        %1362 = vmatprep.subr.mxu0 0.0
        %1363 = vmatpush1.xpose.msra.mxu0 0.0
        %1364 = vmatprep.subr.mxu0 0.0
        %1365 = vmatpush1.xpose.msra.mxu0 0.0
        %1366 = vmatprep.subr.mxu0 0.0
        %1367 = vmatpush1.xpose.msra.mxu0 0.0
        %1368 = vmatprep.subr.mxu0 0.0
        %1369 = vmatpush1.xpose.msra.mxu0 0.0
        %1370 = vmatprep.subr.mxu0 0.0
        %1371 = vmatpush1.xpose.msra.mxu0 0.0
        %1372 = vmatprep.subr.mxu0 0.0
        %1373 = vmatpush1.xpose.msra.mxu0 0.0
        %1374 = vmatprep.subr.mxu0 0.0
        %1375 = vmatpush1.xpose.msra.mxu0 0.0
        %1376 = vmatprep.subr.mxu0 0.0
        %1377 = vmatpush1.xpose.msra.mxu0 0.0
        %1378 = vmatprep.subr.mxu0 0.0
        %1379 = vmatpush1.xpose.msra.mxu0 0.0
        %1380 = vmatprep.subr.mxu0 0.0
        %1381 = vmatpush1.xpose.msra.mxu0 0.0
        %1382 = vmatprep.subr.mxu0 0.0
        %1383 = vmatpush1.xpose.msra.mxu0 0.0
        %1384 = vmatprep.subr.mxu0 0.0
        %1385 = vmatpush1.xpose.msra.mxu0 0.0
        %1386 = vmatprep.mubr.f32.mxu0 0.0
        %1387 = vmatmul.mubr.f32.gmra.mrb[0].mxu0 %v1318
        %v1388 = vpop.f32.mrb[0].mxu0
        %v1389 = vadd.f32 0.0, %v1388
        %v1390 = vpop.f32.mrb[0].mxu0
        %1391 = vdwg.mxu0
        %v1392 = vmul.f32 %v1389, 0.35355338
        %v1393 = vsel %vm797, -1e+09, %v1392
        %v1394 = vsel %vm798, %v1393, -inf
        %1395 = vmax.xlane.f32.xlu0 %v1394
        %v1396 = vpop.xlane.xlu0 %1395
        %v1397 = vsub.f32 %v1393, %v1396
        %v1398 = vmul.f32 %v1397, 1.442695
        %v1399 = vpow.pop %v1398
        %v1400 = vsel %vm798, %v1399, 0.0
        %1401 = vadd.xlane.f32.xlu0 %v1400
        %v1402 = vpop.xlane.xlu0 %1401
        %v1403 = vrcp.pop %v1402
        %v1404 = vmul.f32 %v1399, %v1403
        %1405 = vrot.lane.b32.xlu0 %v794, 104
        %v1406 = vpop.permute.xlu0 %1405
        %v1409 = vsel %vm798, %v1404, 0
        %1411 = vmatprep.subr.mxu0 0.0
        %1412 = vmatpush1.msra.mxu0 %v1406
        %1413 = vmatprep.subr.mxu0 0.0
        %1414 = vmatpush1.msra.mxu0 0.0
        %1415 = vmatprep.subr.mxu0 0.0
        %1416 = vmatpush1.msra.mxu0 0.0
        %1417 = vmatprep.subr.mxu0 0.0
        %1418 = vmatpush1.msra.mxu0 0.0
        %1419 = vmatprep.subr.mxu0 0.0
        %1420 = vmatpush1.msra.mxu0 0.0
        %1421 = vmatprep.subr.mxu0 0.0
        %1422 = vmatpush1.msra.mxu0 0.0
        %1423 = vmatprep.subr.mxu0 0.0
        %1424 = vmatpush1.msra.mxu0 0.0
        %1425 = vmatprep.subr.mxu0 0.0
        %1426 = vmatpush1.msra.mxu0 0.0
        %1427 = vmatprep.subr.mxu0 0.0
        %1428 = vmatpush1.msra.mxu0 0.0
        %1429 = vmatprep.subr.mxu0 0.0
        %1430 = vmatpush1.msra.mxu0 0.0
        %1431 = vmatprep.subr.mxu0 0.0
        %1432 = vmatpush1.msra.mxu0 0.0
        %1433 = vmatprep.subr.mxu0 0.0
        %1434 = vmatpush1.msra.mxu0 0.0
        %1435 = vmatprep.subr.mxu0 0.0
        %1436 = vmatpush1.msra.mxu0 0.0
        %1437 = vmatprep.subr.mxu0 0.0
        %1438 = vmatpush1.msra.mxu0 0.0
        %1439 = vmatprep.subr.mxu0 0.0
        %1440 = vmatpush1.msra.mxu0 0.0
        %1441 = vmatprep.subr.mxu0 0.0
        %1442 = vmatpush1.msra.mxu0 0.0
        %1443 = vmatprep.subr.mxu0 0.0
        %1444 = vmatpush1.msra.mxu0 0.0
        %1445 = vmatprep.subr.mxu0 0.0
        %1446 = vmatpush1.msra.mxu0 0.0
        %1447 = vmatprep.subr.mxu0 0.0
        %1448 = vmatpush1.msra.mxu0 0.0
        %1449 = vmatprep.subr.mxu0 0.0
        %1450 = vmatpush1.msra.mxu0 0.0
        %1451 = vmatprep.subr.mxu0 0.0
        %1452 = vmatpush1.msra.mxu0 0.0
        %1453 = vmatprep.subr.mxu0 0.0
        %1454 = vmatpush1.msra.mxu0 0.0
        %1455 = vmatprep.subr.mxu0 0.0
        %1456 = vmatpush1.msra.mxu0 0.0
        %1457 = vmatprep.subr.mxu0 0.0
        %1458 = vmatpush1.msra.mxu0 0.0
        %1459 = vmatprep.subr.mxu0 0.0
        %1460 = vmatpush1.msra.mxu0 0.0
        %1461 = vmatprep.subr.mxu0 0.0
        %1462 = vmatpush1.msra.mxu0 0.0
        %1463 = vmatprep.subr.mxu0 0.0
        %1464 = vmatpush1.msra.mxu0 0.0
        %1465 = vmatprep.subr.mxu0 0.0
        %1466 = vmatpush1.msra.mxu0 0.0
        %1467 = vmatprep.subr.mxu0 0.0
        %1468 = vmatpush1.msra.mxu0 0.0
        %1469 = vmatprep.subr.mxu0 0.0
        %1470 = vmatpush1.msra.mxu0 0.0
        %1471 = vmatprep.subr.mxu0 0.0
        %1472 = vmatpush1.msra.mxu0 0.0
        %1473 = vmatprep.subr.mxu0 0.0
        %1474 = vmatpush1.msra.mxu0 0.0
        %1475 = vmatprep.mubr.f32.mxu0 0.0
        %1476 = vmatmul.mubr.f32.gmra.mrb[0].mxu0 %v1409
        %v1477 = vpop.f32.mrb[0].mxu0
        %v1478 = vadd.f32 0.0, %v1477
        %v1479 = vpop.f32.mrb[0].mxu0
        %1480 = vdwg.mxu0
        %s1481 = scalar_lea.vmem %s524, 24 [#allocation18]
        %1482 = vst.msk [vmem:[%s1481] sm:$0xff] %vm798, %v1404
        %1484 = vrot.lane.b32.xlu0 %v1478, 24
        %v1485 = vpop.permute.xlu0 %1484
        %vm1487 = vcmask 261312
        %1488 = vst.msk [vmem:[#allocation2] sm:$0xff] %vm1487, %v1485
        %v1489 = vld [vmem:[#allocation2] sm:$0xff]
        %v1490 = vld [vmem:[#allocation15] sm:$0xff]
        %v1491 = vld [vmem:[#allocation15 + $0x8] sm:$0xff]
        %v1492 = vld [vmem:[#allocation15 + $0x10] sm:$0xff]
        %v1493 = vld [vmem:[#allocation15 + $0x18] sm:$0xff]
        %v1495 = vsel %vm533, %v1489, 0
        %v1498 = vsel %vm533, %v1490, 0
        %v1501 = vsel %vm533, %v1491, 0
        %v1504 = vsel %vm533, %v1492, 0
        %v1507 = vsel %vm533, %v1493, 0
        %1509 = vmatprep.subr.mxu0 0.0
        %1510 = vmatpush1.xpose.msra.mxu0 %v1498
        %1511 = vmatprep.subr.mxu0 0.0
        %1512 = vmatpush1.xpose.msra.mxu0 %v1501
        %1513 = vmatprep.subr.mxu0 0.0
        %1514 = vmatpush1.xpose.msra.mxu0 %v1504
        %1515 = vmatprep.subr.mxu0 0.0
        %1516 = vmatpush1.xpose.msra.mxu0 %v1507
        %1517 = vmatprep.subr.mxu0 0.0
        %1518 = vmatpush1.xpose.msra.mxu0 0.0
        %1519 = vmatprep.subr.mxu0 0.0
        %1520 = vmatpush1.xpose.msra.mxu0 0.0
        %1521 = vmatprep.subr.mxu0 0.0
        %1522 = vmatpush1.xpose.msra.mxu0 0.0
        %1523 = vmatprep.subr.mxu0 0.0
        %1524 = vmatpush1.xpose.msra.mxu0 0.0
        %1525 = vmatprep.subr.mxu0 0.0
        %1526 = vmatpush1.xpose.msra.mxu0 0.0
        %1527 = vmatprep.subr.mxu0 0.0
        %1528 = vmatpush1.xpose.msra.mxu0 0.0
        %1529 = vmatprep.subr.mxu0 0.0
        %1530 = vmatpush1.xpose.msra.mxu0 0.0
        %1531 = vmatprep.subr.mxu0 0.0
        %1532 = vmatpush1.xpose.msra.mxu0 0.0
        %1533 = vmatprep.subr.mxu0 0.0
        %1534 = vmatpush1.xpose.msra.mxu0 0.0
        %1535 = vmatprep.subr.mxu0 0.0
        %1536 = vmatpush1.xpose.msra.mxu0 0.0
        %1537 = vmatprep.subr.mxu0 0.0
        %1538 = vmatpush1.xpose.msra.mxu0 0.0
        %1539 = vmatprep.subr.mxu0 0.0
        %1540 = vmatpush1.xpose.msra.mxu0 0.0
        %1541 = vmatprep.subr.mxu0 0.0
        %1542 = vmatpush1.xpose.msra.mxu0 0.0
        %1543 = vmatprep.subr.mxu0 0.0
        %1544 = vmatpush1.xpose.msra.mxu0 0.0
        %1545 = vmatprep.subr.mxu0 0.0
        %1546 = vmatpush1.xpose.msra.mxu0 0.0
        %1547 = vmatprep.subr.mxu0 0.0
        %1548 = vmatpush1.xpose.msra.mxu0 0.0
        %1549 = vmatprep.subr.mxu0 0.0
        %1550 = vmatpush1.xpose.msra.mxu0 0.0
        %1551 = vmatprep.subr.mxu0 0.0
        %1552 = vmatpush1.xpose.msra.mxu0 0.0
        %1553 = vmatprep.subr.mxu0 0.0
        %1554 = vmatpush1.xpose.msra.mxu0 0.0
        %1555 = vmatprep.subr.mxu0 0.0
        %1556 = vmatpush1.xpose.msra.mxu0 0.0
        %1557 = vmatprep.subr.mxu0 0.0
        %1558 = vmatpush1.xpose.msra.mxu0 0.0
        %1559 = vmatprep.subr.mxu0 0.0
        %1560 = vmatpush1.xpose.msra.mxu0 0.0
        %1561 = vmatprep.subr.mxu0 0.0
        %1562 = vmatpush1.xpose.msra.mxu0 0.0
        %1563 = vmatprep.subr.mxu0 0.0
        %1564 = vmatpush1.xpose.msra.mxu0 0.0
        %1565 = vmatprep.subr.mxu0 0.0
        %1566 = vmatpush1.xpose.msra.mxu0 0.0
        %1567 = vmatprep.subr.mxu0 0.0
        %1568 = vmatpush1.xpose.msra.mxu0 0.0
        %1569 = vmatprep.subr.mxu0 0.0
        %1570 = vmatpush1.xpose.msra.mxu0 0.0
        %1571 = vmatprep.subr.mxu0 0.0
        %1572 = vmatpush1.xpose.msra.mxu0 0.0
        %1573 = vmatprep.mubr.f32.mxu0 0.0
        %1574 = vmatmul.mubr.f32.gmra.mrb[0].mxu0 %v1495
        %v1575 = vpop.f32.mrb[0].mxu0
        %v1576 = vadd.f32 0.0, %v1575
        %v1577 = vpop.f32.mrb[0].mxu0
        %1578 = vdwg.mxu0
        %1579 = vst.msk [vmem:[%s517] sm:$0xff] %vm533, %v1576
        %s1580 = sand.u32 %s234, 1
        %s1581 = scalar_lea.sflag [#allocation5], %s1580
        %s1582 = sand.u32 %s234, 1
        %s1583 = smul.addr %s1582, 8
        %s1584 = scalar_lea.vmem [#allocation17], %s1583
        %s1585 = sand.u32 %s260, 1
        %s1586 = scalar_lea.sflag [#allocation19], %s1585
        %s1587 = sand.u32 %s260, 1
        %s1588 = smul.addr %s1587, 32
        %s1589 = scalar_lea.vmem [#allocation18], %s1588
        // Predicated region
        $region85: #{tpu_custom_call.1} parent=51 // pred_check
          %p1590 = pneg %p244
        $region86: #{tpu_custom_call.1} parent=51 // pred_check_branch
          %1592 = sbr.rel (%p1590) target = $region88
        $region87: #{tpu_custom_call.1} parent=51 // pred_region
          %s1594 = ssub.s32 128, 128
          %1595 = vsyncadd %s1581, %s1594
          %s1596 = smul.addr %s38, 128
          %s1597 = scalar_lea.hbm %s8, %s1596
          %s1599 = sshll.u32 %s1584, 4
          %s1600 = int_to_ptr.vmem [resolvable:$true] %s1599
          %1602 = dma.vmem_to_hbm [thread:$0]  %s1600, 128, %s1597, %s1581
        $region88: #{tpu_custom_call.1} parent=51 // pred_fallthru
          _
        // Predicated region
        $region89: #{tpu_custom_call.1} parent=51 // pred_check
          %p1603 = pneg %p270
        $region90: #{tpu_custom_call.1} parent=51 // pred_check_branch
          %1605 = sbr.rel (%p1603) target = $region92
        $region91: #{tpu_custom_call.1} parent=51 // pred_region
          %s1607 = ssub.s32 512, 512
          %1608 = vsyncadd %s1586, %s1607
          %s1609 = smul.addr %s38, 4
          %s1610 = smul.addr %s1609, 128
          %s1611 = scalar_lea.hbm %s9, %s1610
          %s1612 = sshll.u32 %s1589, 4
          %s1613 = int_to_ptr.vmem [resolvable:$true] %s1612
          %1618 = dma.vmem_to_hbm [thread:$0]  %s1613, 512, %s1611, %s1586, 128, 128, 8
        $region92: #{tpu_custom_call.1} parent=51 // pred_fallthru
          _
      $region52: #{tpu_custom_call.1} parent=5 // pred_fallthru
        _
      %p1619 = scmp.le.s32.totalorder 2, %s33
      // Predicated region
      $region93: #{tpu_custom_call.1} parent=5 // pred_check
        %p1620 = pneg %p1619
      $region94: #{tpu_custom_call.1} parent=5 // pred_check_branch
        %1622 = sbr.rel (%p1620) target = $region96
      $region95: #{tpu_custom_call.1} parent=5 // pred_region
        %s1623 = ssub.s32 %s33, 2
        // Predicated region
        $region97: #{tpu_custom_call.1} parent=95 // pred_check
          %p1624 = pneg %p250
        $region98: #{tpu_custom_call.1} parent=95 // pred_check_branch
          %1626 = sbr.rel (%p1624) target = $region100
        $region99: #{tpu_custom_call.1} parent=95 // pred_region
          %s1627 = sand.u32 %s235, 1
          %s1628 = scalar_lea.sflag [#allocation5], %s1627
          %s1629 = sand.u32 %s235, 1
          %s1630 = smul.addr %s1629, 8
          %s1631 = scalar_lea.vmem [#allocation17], %s1630
          %1632 = dma.done %s1628, 128
        $region100: #{tpu_custom_call.1} parent=95 // pred_fallthru
          _
        // Predicated region
        $region101: #{tpu_custom_call.1} parent=95 // pred_check
          %p1633 = pneg %p276
        $region102: #{tpu_custom_call.1} parent=95 // pred_check_branch
          %1635 = sbr.rel (%p1633) target = $region104
        $region103: #{tpu_custom_call.1} parent=95 // pred_region
          %s1636 = sand.u32 %s261, 1
          %s1637 = scalar_lea.sflag [#allocation19], %s1636
          %s1638 = sand.u32 %s261, 1
          %s1639 = smul.addr %s1638, 32
          %s1640 = scalar_lea.vmem [#allocation18], %s1639
          %1641 = dma.done %s1637, 512
        $region104: #{tpu_custom_call.1} parent=95 // pred_fallthru
          _
      $region96: #{tpu_custom_call.1} parent=5 // pred_fallthru
        _
    $region6: #{tpu_custom_call.1} parent=1 // loop_footer
      %s37 = sadd.s32 1, %s33
    $region7: #{tpu_custom_call.1} parent=1 // loop_footer_branch
      %32 = sbr.rel target = $region3
    $region8: #{tpu_custom_call.1} parent=1 // loop_exit
      _
    %1642 = vsyncpa [#allocation4], 1
    %s1643 = scalar_lea.sflag [#allocation4], 1
    %1644 = vsyncpa %s1643, 1
    %1645 = vsyncpa [#allocation7], 1
    %s1646 = scalar_lea.sflag [#allocation7], 1
    %1647 = vsyncpa %s1646, 1
    %1648 = vsyncpa [#allocation10], 1
    %s1649 = scalar_lea.sflag [#allocation10], 1
    %1650 = vsyncpa %s1649, 1
    %1651 = vsyncpa [#allocation13], 1
    %1652 = vsyncpa [#allocation16], 1
    %1653 = vsyncpa [#allocation5], 1
    %s1654 = scalar_lea.sflag [#allocation5], 1
    %1655 = vsyncpa %s1654, 1
    %1656 = vsyncpa [#allocation19], 1
    %s1657 = scalar_lea.sflag [#allocation19], 1
    %1658 = vsyncpa %s1657, 1

</llo_original>
